<compile_context>
chip_gen: v5e
topology: v5e:2x2
jax: 0.10.0
libtpu: 0.0.40
codegen_flags: <defaults>
</compile_context>

<pallas_src>
import functools

import jax
import jax.numpy as jnp
from jax import lax
from jax.experimental import pallas as pl
from jax.experimental.pallas import tpu as pltpu


def _round_up(x, m):
    return ((x + m - 1) // m) * m


def _round_down_mult(x, m):
    return max(m, (x // m) * m)


def _cdiv(a, b):
    return (a + b - 1) // b


def _mvsdpa_kernel(q_ref, kf_ref, vf_ref, out_ref, attn_ref, *,
                   inv_temperature, L, d_k, d_v, chunk):
    """One batch tile.

    kf_ref / vf_ref are lane-dense, flattened to (tile, L*d_k) / (tile, L*d_v).
    The tile is processed in `chunk`-row sub-chunks so intermediates stay in a
    handful of vregs regardless of how large the DMA tile is (no VMEM spill).
    """
    n_chunks = q_ref.shape[0] // chunk     # static

    def body(c, carry):
        r = pl.multiple_of(c * chunk, chunk)
        rows = pl.ds(r, chunk)

        q = q_ref[rows, :]                                       # (chunk, d_k)

        # scores[b, l] = sum_d q[b, d] * k[b, l, d]   (f32 accumulation)
        cols = []
        for l in range(L):
            kl = kf_ref[rows, pl.ds(l * d_k, d_k)]               # (chunk, d_k)
            cols.append(jnp.sum(q * kl, axis=1, keepdims=True,
                                dtype=jnp.float32))
        scores = jnp.concatenate(cols, axis=1) * inv_temperature  # (chunk, L)

        # numerically stable softmax over L (== torch.nn.Softmax(dim=1)).
        # Exact divide: approx reciprocal is too coarse for the returned attn.
        m = jnp.max(scores, axis=1, keepdims=True)
        e = jnp.exp(scores - m)
        attn = e / jnp.sum(e, axis=1, keepdims=True)             # (chunk, L) f32

        # dropout: identity (inference / eval mode)

        # output[b, d] = sum_l attn[b, l] * v[b, l, d]   (f32 accumulation)
        attn_lo = attn.astype(vf_ref.dtype)
        acc = jnp.zeros((chunk, d_v), jnp.float32)
        for l in range(L):
            vl = vf_ref[rows, pl.ds(l * d_v, d_v)]               # (chunk, d_v)
            acc = acc + (attn_lo[:, l:l + 1] * vl).astype(jnp.float32)

        out_ref[rows, :] = acc.astype(out_ref.dtype)
        attn_ref[rows, :] = attn.astype(attn_ref.dtype)
        return carry

    lax.fori_loop(0, n_chunks, body, 0)


def _pick_batch_tile(B, L, d_k, d_v, itemsize, vmem_physical, chunk):
    """Per-grid-step batch tile: >=4 MiB of k+v per step, within a
    generation-aware VMEM budget, with >=4 grid steps when the batch allows
    it (>=2 per TensorCore on v7x's megacore)."""
    if B <= 8:
        return B
    B8 = _round_up(B, 8)
    kv_row = L * (d_k + d_v) * itemsize                    # dense k+v bytes/row
    pad_row = (_round_up(d_k, 128) + _round_up(d_v, 128)
               + _round_up(L, 128)) * itemsize             # q/out/attn lane padding
    row_vmem = kv_row + pad_row

    # (1) >= 4 MiB of k+v DMA per grid step (kernel is HBM-bound).
    tb = _round_up(max(8, (4 << 20) // max(kv_row, 1)), 8)
    tb = min(tb, B8)

    # (2) VMEM budget per block set (Pallas double-buffers each block):
    #     40 MiB on 128-MiB parts (v5e/v6e), 20 MiB on v7x (64 MiB/TC).
    tile_budget = (40 << 20) if vmem_physical > (64 << 20) else (20 << 20)
    while tb > 8 and tb * row_vmem > tile_budget:
        tb = _round_down_mult(tb // 2, 8)

    # (3) keep >= 4 grid steps on the "parallel" batch axis when possible.
    if B8 >= 32:
        while tb > 8 and _cdiv(B8, tb) < 4:
            tb = _round_down_mult(tb // 2, 8)

    # keep the inner compute chunk an exact divisor of the tile
    if tb >= chunk:
        tb = _round_down_mult(tb, chunk)
    return max(8, min(tb, B8))


def matrix_vector_sdpa(q, k, v, temperature, *, batch_tile=None, interpret=False):
    """Pallas implementation of MatrixVectorScaledDotProductAttention.forward.

    q: (B, d_k), k: (B, L, d_k), v: (B, L, d_v)
    returns: output (B, d_v), attn (B, L)
    """
    B, d_k = q.shape
    Bk, L, d_k2 = k.shape
    Bv, L2, d_v = v.shape
    assert B == Bk == Bv and d_k == d_k2 and L == L2

    itemsize = jnp.dtype(q.dtype).itemsize

    # Generation-aware VMEM: assume v7x's 64 MiB/TC unless the runtime says more.
    vmem_physical = 64 << 20
    try:
        queried = int(getattr(pltpu.get_tpu_info(), "vmem_capacity_bytes", 0))
        if queried >= (32 << 20):
            vmem_physical = queried
    except Exception:
        pass

    CHUNK = 64  # inner compute sub-chunk (f32 working set bounded on all gens)

    if batch_tile is None:
        tb = _pick_batch_tile(B, L, d_k, d_v, itemsize, vmem_physical, CHUNK)
    else:
        tb = max(1, min(int(batch_tile), B))
        if tb != B:
            tb = _round_down_mult(tb, 8)

    chunk = CHUNK if (tb >= CHUNK and tb % CHUNK == 0) else (8 if tb % 8 == 0 else tb)

    # Lane-dense k/v: collapse contiguous minor dims (free bitcast reshape).
    kf = k.reshape(B, L * d_k)
    vf = v.reshape(B, L * d_v)

    # No jnp.pad of k/v: ragged tail block (if any) uses Pallas' masked
    # partial-block reads/writes; batch rows are fully independent.
    grid = (_cdiv(B, tb),)

    kv_row = L * (d_k + d_v) * itemsize
    pad_row = (_round_up(d_k, 128) + _round_up(d_v, 128)
               + _round_up(L, 128)) * itemsize
    block_bytes = tb * (kv_row + pad_row)
    vmem_cap = (96 << 20) if vmem_physical > (64 << 20) else (48 << 20)
    vmem_limit = int(min(vmem_cap, max(32 << 20, 2 * block_bytes + (8 << 20))))

    kernel = functools.partial(
        _mvsdpa_kernel,
        inv_temperature=float(1.0 / float(temperature)),
        L=L, d_k=d_k, d_v=d_v, chunk=chunk)

    cost = pl.CostEstimate(
        flops=2 * B * L * (d_k + d_v) + 5 * B * L,
        transcendentals=B * L,
        bytes_accessed=B * (d_k + L * d_k + L * d_v + d_v + L) * itemsize)

    out, attn = pl.pallas_call(
        kernel,
        out_shape=(
            jax.ShapeDtypeStruct((B, d_v), q.dtype),
            jax.ShapeDtypeStruct((B, L), q.dtype),
        ),
        grid_spec=pltpu.PrefetchScalarGridSpec(
            num_scalar_prefetch=0,
            grid=grid,
            in_specs=[
                pl.BlockSpec((tb, d_k), lambda i: (i, 0)),
                pl.BlockSpec((tb, L * d_k), lambda i: (i, 0)),
                pl.BlockSpec((tb, L * d_v), lambda i: (i, 0)),
            ],
            out_specs=[
                pl.BlockSpec((tb, d_v), lambda i: (i, 0)),
                pl.BlockSpec((tb, L), lambda i: (i, 0)),
            ],
        ),
        compiler_params=pltpu.CompilerParams(
            dimension_semantics=("parallel",),
            vmem_limit_bytes=vmem_limit,
        ),
        cost_estimate=cost,
        interpret=interpret,
    )(q, kf, vf)

    return out, attn


def _reference(q, k, v, temperature):
    attn = jnp.sum(q[:, None, :] * k, axis=2) / temperature
    attn = jax.nn.softmax(attn, axis=1)
    out = jnp.sum(attn[:, :, None] * v, axis=1)
    return out, attn


if __name__ == "__main__":
    key = jax.random.PRNGKey(0)
    kq, kk, kv = jax.random.split(key, 3)

    B, L, d_k, d_v = 256, 8, 32, 32          # B = n*b
    temperature = float(d_k) ** 0.5

    q = jax.random.normal(kq, (B, d_k), dtype=jnp.float32)
    k = jax.random.normal(kk, (B, L, d_k), dtype=jnp.float32)
    v = jax.random.normal(kv, (B, L, d_v), dtype=jnp.float32)

    out, attn = matrix_vector_sdpa(q, k, v, temperature)
    out = jax.block_until_ready(out)
    attn = jax.block_until_ready(attn)

    ref_out, ref_attn = _reference(q, k, v, temperature)
    assert out.shape == (B, d_v) and attn.shape == (B, L)
    assert jnp.allclose(out, ref_out, atol=1e-3, rtol=1e-3), "output mismatch"
    assert jnp.allclose(attn, ref_attn, atol=1e-3, rtol=1e-3), "attn mismatch"

    print("KERNEL_OK")
</pallas_src>

<mosaic_0001>
module attributes {stable_mosaic.version = 11 : i64} {
  func.func @_mvsdpa_kernel(%arg0: i32, %arg1: memref<64x32xf32, #tpu.memory_space<vmem>>, %arg2: memref<64x256xf32, #tpu.memory_space<vmem>>, %arg3: memref<64x256xf32, #tpu.memory_space<vmem>>, %arg4: memref<64x32xf32, #tpu.memory_space<vmem>>, %arg5: memref<64x8xf32, #tpu.memory_space<vmem>>) attributes {dimension_semantics = [#tpu.dimension_semantics<parallel>], iteration_bounds = array<i64: 4>, scalar_prefetch = 0 : i64, scratch_operands = 0 : i64, tpu.core_type = #tpu.core_type<tc>, window_params = [{transform_indices = @transform_0, window_bounds = array<i64: 64, 32>}, {transform_indices = @transform_1, window_bounds = array<i64: 64, 256>}, {transform_indices = @transform_2, window_bounds = array<i64: 64, 256>}, {transform_indices = @transform_3, window_bounds = array<i64: 64, 32>}, {transform_indices = @transform_4, window_bounds = array<i64: 64, 8>}]} {
    %c0_i32 = arith.constant 0 : i32
    %c64_i32 = arith.constant 64 : i32
    %0 = arith.muli %c0_i32, %c64_i32 : i32
    %1 = tpu.assume_multiple %0, 64 : i32
    %2 = arith.index_cast %1 : i32 to index
    %c0 = arith.constant 0 : index
    %3 = vector.load %arg1[%2, %c0] : memref<64x32xf32, #tpu.memory_space<vmem>>, vector<64x32xf32>
    %4 = arith.index_cast %1 : i32 to index
    %c0_0 = arith.constant 0 : index
    %5 = vector.load %arg2[%4, %c0_0] : memref<64x256xf32, #tpu.memory_space<vmem>>, vector<64x32xf32>
    %6 = arith.mulf %3, %5 : vector<64x32xf32>
    %cst = arith.constant dense<0.000000e+00> : vector<64xf32>
    %7 = vector.multi_reduction <add>, %6, %cst [1] : vector<64x32xf32> to vector<64xf32>
    %8 = vector.shape_cast %7 : vector<64xf32> to vector<64x1xf32>
    %9 = arith.index_cast %1 : i32 to index
    %c32 = arith.constant 32 : index
    %10 = vector.load %arg2[%9, %c32] : memref<64x256xf32, #tpu.memory_space<vmem>>, vector<64x32xf32>
    %11 = arith.mulf %3, %10 : vector<64x32xf32>
    %cst_1 = arith.constant dense<0.000000e+00> : vector<64xf32>
    %12 = vector.multi_reduction <add>, %11, %cst_1 [1] : vector<64x32xf32> to vector<64xf32>
    %13 = vector.shape_cast %12 : vector<64xf32> to vector<64x1xf32>
    %14 = arith.index_cast %1 : i32 to index
    %c64 = arith.constant 64 : index
    %15 = vector.load %arg2[%14, %c64] : memref<64x256xf32, #tpu.memory_space<vmem>>, vector<64x32xf32>
    %16 = arith.mulf %3, %15 : vector<64x32xf32>
    %cst_2 = arith.constant dense<0.000000e+00> : vector<64xf32>
    %17 = vector.multi_reduction <add>, %16, %cst_2 [1] : vector<64x32xf32> to vector<64xf32>
    %18 = vector.shape_cast %17 : vector<64xf32> to vector<64x1xf32>
    %19 = arith.index_cast %1 : i32 to index
    %c96 = arith.constant 96 : index
    %20 = vector.load %arg2[%19, %c96] : memref<64x256xf32, #tpu.memory_space<vmem>>, vector<64x32xf32>
    %21 = arith.mulf %3, %20 : vector<64x32xf32>
    %cst_3 = arith.constant dense<0.000000e+00> : vector<64xf32>
    %22 = vector.multi_reduction <add>, %21, %cst_3 [1] : vector<64x32xf32> to vector<64xf32>
    %23 = vector.shape_cast %22 : vector<64xf32> to vector<64x1xf32>
    %24 = arith.index_cast %1 : i32 to index
    %c128 = arith.constant 128 : index
    %25 = vector.load %arg2[%24, %c128] : memref<64x256xf32, #tpu.memory_space<vmem>>, vector<64x32xf32>
    %26 = arith.mulf %3, %25 : vector<64x32xf32>
    %cst_4 = arith.constant dense<0.000000e+00> : vector<64xf32>
    %27 = vector.multi_reduction <add>, %26, %cst_4 [1] : vector<64x32xf32> to vector<64xf32>
    %28 = vector.shape_cast %27 : vector<64xf32> to vector<64x1xf32>
    %29 = arith.index_cast %1 : i32 to index
    %c160 = arith.constant 160 : index
    %30 = vector.load %arg2[%29, %c160] : memref<64x256xf32, #tpu.memory_space<vmem>>, vector<64x32xf32>
    %31 = arith.mulf %3, %30 : vector<64x32xf32>
    %cst_5 = arith.constant dense<0.000000e+00> : vector<64xf32>
    %32 = vector.multi_reduction <add>, %31, %cst_5 [1] : vector<64x32xf32> to vector<64xf32>
    %33 = vector.shape_cast %32 : vector<64xf32> to vector<64x1xf32>
    %34 = arith.index_cast %1 : i32 to index
    %c192 = arith.constant 192 : index
    %35 = vector.load %arg2[%34, %c192] : memref<64x256xf32, #tpu.memory_space<vmem>>, vector<64x32xf32>
    %36 = arith.mulf %3, %35 : vector<64x32xf32>
    %cst_6 = arith.constant dense<0.000000e+00> : vector<64xf32>
    %37 = vector.multi_reduction <add>, %36, %cst_6 [1] : vector<64x32xf32> to vector<64xf32>
    %38 = vector.shape_cast %37 : vector<64xf32> to vector<64x1xf32>
    %39 = arith.index_cast %1 : i32 to index
    %c224 = arith.constant 224 : index
    %40 = vector.load %arg2[%39, %c224] : memref<64x256xf32, #tpu.memory_space<vmem>>, vector<64x32xf32>
    %41 = arith.mulf %3, %40 : vector<64x32xf32>
    %cst_7 = arith.constant dense<0.000000e+00> : vector<64xf32>
    %42 = vector.multi_reduction <add>, %41, %cst_7 [1] : vector<64x32xf32> to vector<64xf32>
    %43 = vector.shape_cast %42 : vector<64xf32> to vector<64x1xf32>
    %44 = tpu.concatenate %8, %13, %18, %23, %28, %33, %38, %43 in 1 : vector<64x1xf32>, vector<64x1xf32>, vector<64x1xf32>, vector<64x1xf32>, vector<64x1xf32>, vector<64x1xf32>, vector<64x1xf32>, vector<64x1xf32> -> vector<64x8xf32>
    %cst_8 = arith.constant 0.176776692 : f32
    %45 = vector.broadcast %cst_8 : f32 to vector<64x8xf32>
    %46 = arith.mulf %44, %45 : vector<64x8xf32>
    %cst_9 = arith.constant dense<0xFF800000> : vector<64xf32>
    %47 = vector.multi_reduction <maximumf>, %46, %cst_9 [1] : vector<64x8xf32> to vector<64xf32>
    %48 = vector.shape_cast %47 : vector<64xf32> to vector<64x1xf32>
    %49 = vector.broadcast %48 : vector<64x1xf32> to vector<64x8xf32>
    %50 = arith.subf %46, %49 : vector<64x8xf32>
    %51 = math.exp %50 : vector<64x8xf32>
    %cst_10 = arith.constant dense<0.000000e+00> : vector<64xf32>
    %52 = vector.multi_reduction <add>, %51, %cst_10 [1] : vector<64x8xf32> to vector<64xf32>
    %53 = vector.shape_cast %52 : vector<64xf32> to vector<64x1xf32>
    %54 = vector.broadcast %53 : vector<64x1xf32> to vector<64x8xf32>
    %55 = arith.divf %51, %54 : vector<64x8xf32>
    %cst_11 = arith.constant 0.000000e+00 : f32
    %56 = vector.broadcast %cst_11 : f32 to vector<64x32xf32>
    %57 = arith.index_cast %1 : i32 to index
    %c0_12 = arith.constant 0 : index
    %58 = vector.load %arg3[%57, %c0_12] : memref<64x256xf32, #tpu.memory_space<vmem>>, vector<64x32xf32>
    %59 = vector.extract_strided_slice %55 {offsets = [0, 0], sizes = [64, 1], strides = [1, 1]} : vector<64x8xf32> to vector<64x1xf32>
    %60 = vector.broadcast %59 : vector<64x1xf32> to vector<64x32xf32>
    %61 = arith.mulf %60, %58 : vector<64x32xf32>
    %62 = arith.addf %56, %61 : vector<64x32xf32>
    %63 = arith.index_cast %1 : i32 to index
    %c32_13 = arith.constant 32 : index
    %64 = vector.load %arg3[%63, %c32_13] : memref<64x256xf32, #tpu.memory_space<vmem>>, vector<64x32xf32>
    %65 = vector.extract_strided_slice %55 {offsets = [0, 1], sizes = [64, 1], strides = [1, 1]} : vector<64x8xf32> to vector<64x1xf32>
    %66 = vector.broadcast %65 : vector<64x1xf32> to vector<64x32xf32>
    %67 = arith.mulf %66, %64 : vector<64x32xf32>
    %68 = arith.addf %62, %67 : vector<64x32xf32>
    %69 = arith.index_cast %1 : i32 to index
    %c64_14 = arith.constant 64 : index
    %70 = vector.load %arg3[%69, %c64_14] : memref<64x256xf32, #tpu.memory_space<vmem>>, vector<64x32xf32>
    %71 = vector.extract_strided_slice %55 {offsets = [0, 2], sizes = [64, 1], strides = [1, 1]} : vector<64x8xf32> to vector<64x1xf32>
    %72 = vector.broadcast %71 : vector<64x1xf32> to vector<64x32xf32>
    %73 = arith.mulf %72, %70 : vector<64x32xf32>
    %74 = arith.addf %68, %73 : vector<64x32xf32>
    %75 = arith.index_cast %1 : i32 to index
    %c96_15 = arith.constant 96 : index
    %76 = vector.load %arg3[%75, %c96_15] : memref<64x256xf32, #tpu.memory_space<vmem>>, vector<64x32xf32>
    %77 = vector.extract_strided_slice %55 {offsets = [0, 3], sizes = [64, 1], strides = [1, 1]} : vector<64x8xf32> to vector<64x1xf32>
    %78 = vector.broadcast %77 : vector<64x1xf32> to vector<64x32xf32>
    %79 = arith.mulf %78, %76 : vector<64x32xf32>
    %80 = arith.addf %74, %79 : vector<64x32xf32>
    %81 = arith.index_cast %1 : i32 to index
    %c128_16 = arith.constant 128 : index
    %82 = vector.load %arg3[%81, %c128_16] : memref<64x256xf32, #tpu.memory_space<vmem>>, vector<64x32xf32>
    %83 = vector.extract_strided_slice %55 {offsets = [0, 4], sizes = [64, 1], strides = [1, 1]} : vector<64x8xf32> to vector<64x1xf32>
    %84 = vector.broadcast %83 : vector<64x1xf32> to vector<64x32xf32>
    %85 = arith.mulf %84, %82 : vector<64x32xf32>
    %86 = arith.addf %80, %85 : vector<64x32xf32>
    %87 = arith.index_cast %1 : i32 to index
    %c160_17 = arith.constant 160 : index
    %88 = vector.load %arg3[%87, %c160_17] : memref<64x256xf32, #tpu.memory_space<vmem>>, vector<64x32xf32>
    %89 = vector.extract_strided_slice %55 {offsets = [0, 5], sizes = [64, 1], strides = [1, 1]} : vector<64x8xf32> to vector<64x1xf32>
    %90 = vector.broadcast %89 : vector<64x1xf32> to vector<64x32xf32>
    %91 = arith.mulf %90, %88 : vector<64x32xf32>
    %92 = arith.addf %86, %91 : vector<64x32xf32>
    %93 = arith.index_cast %1 : i32 to index
    %c192_18 = arith.constant 192 : index
    %94 = vector.load %arg3[%93, %c192_18] : memref<64x256xf32, #tpu.memory_space<vmem>>, vector<64x32xf32>
    %95 = vector.extract_strided_slice %55 {offsets = [0, 6], sizes = [64, 1], strides = [1, 1]} : vector<64x8xf32> to vector<64x1xf32>
    %96 = vector.broadcast %95 : vector<64x1xf32> to vector<64x32xf32>
    %97 = arith.mulf %96, %94 : vector<64x32xf32>
    %98 = arith.addf %92, %97 : vector<64x32xf32>
    %99 = arith.index_cast %1 : i32 to index
    %c224_19 = arith.constant 224 : index
    %100 = vector.load %arg3[%99, %c224_19] : memref<64x256xf32, #tpu.memory_space<vmem>>, vector<64x32xf32>
    %101 = vector.extract_strided_slice %55 {offsets = [0, 7], sizes = [64, 1], strides = [1, 1]} : vector<64x8xf32> to vector<64x1xf32>
    %102 = vector.broadcast %101 : vector<64x1xf32> to vector<64x32xf32>
    %103 = arith.mulf %102, %100 : vector<64x32xf32>
    %104 = arith.addf %98, %103 : vector<64x32xf32>
    %105 = arith.index_cast %1 : i32 to index
    %c0_20 = arith.constant 0 : index
    %106 = vector.load %arg4[%105, %c0_20] : memref<64x32xf32, #tpu.memory_space<vmem>>, vector<64x32xf32>
    tpu.vector_store %arg4[%105, %c0_20], %104 {strides = array<i32>} : memref<64x32xf32, #tpu.memory_space<vmem>>, vector<64x32xf32>,
    %107 = arith.index_cast %1 : i32 to index
    %c0_21 = arith.constant 0 : index
    %108 = vector.load %arg5[%107, %c0_21] : memref<64x8xf32, #tpu.memory_space<vmem>>, vector<64x8xf32>
    tpu.vector_store %arg5[%107, %c0_21], %55 {strides = array<i32>} : memref<64x8xf32, #tpu.memory_space<vmem>>, vector<64x8xf32>,
    %c1_i32 = arith.constant 1 : i32
    return
  }
  func.func @transform_0(%arg0: i32) -> (i32, i32) {
    %c0_i32 = arith.constant 0 : i32
    %c0_i32_0 = arith.constant 0 : i32
    return %arg0, %c0_i32 : i32, i32
  }
  func.func @transform_1(%arg0: i32) -> (i32, i32) {
    %c0_i32 = arith.constant 0 : i32
    %c0_i32_0 = arith.constant 0 : i32
    return %arg0, %c0_i32 : i32, i32
  }
  func.func @transform_2(%arg0: i32) -> (i32, i32) {
    %c0_i32 = arith.constant 0 : i32
    %c0_i32_0 = arith.constant 0 : i32
    return %arg0, %c0_i32 : i32, i32
  }
  func.func @transform_3(%arg0: i32) -> (i32, i32) {
    %c0_i32 = arith.constant 0 : i32
    %c0_i32_0 = arith.constant 0 : i32
    return %arg0, %c0_i32 : i32, i32
  }
  func.func @transform_4(%arg0: i32) -> (i32, i32) {
    %c0_i32 = arith.constant 0 : i32
    %c0_i32_0 = arith.constant 0 : i32
    return %arg0, %c0_i32 : i32, i32
  }
}

</mosaic_0001>

<llo_original>
// kernel: tpu_custom_call.1
$region0: #{tpu_custom_call.1}
  #allocation0 [shape = 'u32[]', space=smem, size = 0x4, offset = 0x4, fixed_abs, tag = 'smem constant byte address 0x4 - core index']
  #allocation1 [shape = 'u32[72,128]{1,0:T(1,128)}', space=vmem, size = 0x9000, scoped, tag = 'internal scratch']
  %s0 = inlined_call_operand.vmem [shape: f32[256,32], index: 0, kind: input, shape index: {}]
  %s1 = inlined_call_operand.hbm [shape: f32[256,256], index: 1, kind: input, shape index: {}]
  %s2 = inlined_call_operand.hbm [shape: f32[256,256], index: 2, kind: input, shape index: {}]
  %s3 = inlined_call_operand.vmem [shape: f32[256,32], index: 3, kind: output, shape index: {0}]
  %s4 = inlined_call_operand.vmem [shape: f32[256,8], index: 4, kind: output, shape index: {1}]
  %5 = xla_tuple %s3, %s4
  %s6 = sld [smem:[#allocation0]]
  $region61: #{tpu_custom_call.1} parent=0
    _
  %s8 = ssub.s32 1, %s6
  %s9 = scalar_select 0, %s8, %s6
  $region1: #{tpu_custom_call.1} parent=0
    #allocation2 [shape = 'u8[131072]{0}', space=vmem, size = 0x20000, scoped, tag = 'input window, operand 1']
    #allocation3 [shape = 's32[2]{0}', space=sflag, size = 0x8, scoped, tag = 'scoped memory for tpu_custom_call.1']
    #allocation4 [shape = 'u8[131072]{0}', space=vmem, size = 0x20000, scoped, tag = 'input window, operand 2']
    #allocation5 [shape = 's32[2]{0}', space=sflag, size = 0x8, scoped, tag = 'scoped memory for tpu_custom_call.1']
    %10 = vsyncpa [#allocation3], 0
    %s11 = scalar_lea.sflag [#allocation3], 1
    %12 = vsyncpa %s11, 0
    %13 = vsyncpa [#allocation5], 0
    %s14 = scalar_lea.sflag [#allocation5], 1
    %15 = vsyncpa %s14, 0
    loop: start=0, step=1, limit=6
    $region2: #{tpu_custom_call.1} parent=1 // loop_pre_header
      _
    $region3: #{tpu_custom_call.1} parent=1 // loop_header
      %s17 = sphi 0, %s21
      %p18 = scmp.ge.s32.totalorder %s17, 6
      %s27 = sphi 0, %s29
      %s30 = sphi 0, %s27
      %s31 = sphi 0, %s30
      %s47 = sphi 0, %s31
      %s53 = sphi 0, %s55
      %s56 = sphi 0, %s53
      %s57 = sphi 0, %s56
      %s73 = sphi 0, %s57
      %s79 = sphi 0, %s81
      %s82 = sphi 0, %s79
      %s83 = sphi 0, %s82
      %s99 = sphi 0, %s83
      %s105 = sphi 0, %s107
      %s108 = sphi 0, %s105
      %s109 = sphi 0, %s108
      %s125 = sphi 0, %s109
      %s131 = sphi 0, %s133
      %s134 = sphi 0, %s131
      %s135 = sphi 0, %s134
      %s151 = sphi 0, %s135
    $region4: #{tpu_custom_call.1} parent=1 // loop_header_branch
      %20 = sbr.rel (%p18) target = $region8
    $region5: #{tpu_custom_call.1} parent=1 // loop_body
      %s22 = ssub.s32 %s17, 1
      %s23 = ssub.s32 %s17, 2
      %s24 = sadd.s32 %s17, 1
      %s25 = ssub.s32 %s17, %s24
      %p26 = scmp.eq.s32.totalorder %s25, 0
      %s28 = sadd.s32 %s27, 1
      %s29 = scalar_select %p26, %s27, %s28
      %p32 = pneg %p26
      %p33 = scmp.eq.s32.totalorder %s17, 3
      %p34 = por %p32, %p33
      %p35 = scmp.ne.s32.totalorder %s27, %s30
      %p36 = scmp.eq.s32.totalorder %s17, 0
      %p37 = por %p35, %p36
      %p38 = scmp.ne.s32.totalorder %s27, %s30
      %p39 = scmp.eq.s32.totalorder %s22, 3
      %p40 = por %p38, %p39
      %p41 = scmp.ne.s32.totalorder %s30, %s31
      %p42 = scmp.eq.s32.totalorder %s22, 0
      %p43 = por %p41, %p42
      %p44 = scmp.ne.s32.totalorder %s30, %s31
      %p45 = scmp.eq.s32.totalorder %s23, 3
      %p46 = por %p44, %p45
      %p48 = scmp.ne.s32.totalorder %s31, %s47
      %p49 = scmp.eq.s32.totalorder %s23, 0
      %p50 = por %p48, %p49
      %s51 = ssub.s32 %s17, %s24
      %p52 = scmp.eq.s32.totalorder %s51, 0
      %s54 = sadd.s32 %s53, 1
      %s55 = scalar_select %p52, %s53, %s54
      %p58 = pneg %p52
      %p59 = scmp.eq.s32.totalorder %s17, 3
      %p60 = por %p58, %p59
      %p61 = scmp.ne.s32.totalorder %s53, %s56
      %p62 = scmp.eq.s32.totalorder %s17, 0
      %p63 = por %p61, %p62
      %p64 = scmp.ne.s32.totalorder %s53, %s56
      %p65 = scmp.eq.s32.totalorder %s22, 3
      %p66 = por %p64, %p65
      %p67 = scmp.ne.s32.totalorder %s56, %s57
      %p68 = scmp.eq.s32.totalorder %s22, 0
      %p69 = por %p67, %p68
      %p70 = scmp.ne.s32.totalorder %s56, %s57
      %p71 = scmp.eq.s32.totalorder %s23, 3
      %p72 = por %p70, %p71
      %p74 = scmp.ne.s32.totalorder %s57, %s73
      %p75 = scmp.eq.s32.totalorder %s23, 0
      %p76 = por %p74, %p75
      %s77 = ssub.s32 %s17, %s24
      %p78 = scmp.eq.s32.totalorder %s77, 0
      %s80 = sadd.s32 %s79, 1
      %s81 = scalar_select %p78, %s79, %s80
      %p84 = pneg %p78
      %p85 = scmp.eq.s32.totalorder %s17, 3
      %p86 = por %p84, %p85
      %p87 = scmp.ne.s32.totalorder %s79, %s82
      %p88 = scmp.eq.s32.totalorder %s17, 0
      %p89 = por %p87, %p88
      %p90 = scmp.ne.s32.totalorder %s79, %s82
      %p91 = scmp.eq.s32.totalorder %s22, 3
      %p92 = por %p90, %p91
      %p93 = scmp.ne.s32.totalorder %s82, %s83
      %p94 = scmp.eq.s32.totalorder %s22, 0
      %p95 = por %p93, %p94
      %p96 = scmp.ne.s32.totalorder %s82, %s83
      %p97 = scmp.eq.s32.totalorder %s23, 3
      %p98 = por %p96, %p97
      %p100 = scmp.ne.s32.totalorder %s83, %s99
      %p101 = scmp.eq.s32.totalorder %s23, 0
      %p102 = por %p100, %p101
      %s103 = ssub.s32 %s17, %s24
      %p104 = scmp.eq.s32.totalorder %s103, 0
      %s106 = sadd.s32 %s105, 1
      %s107 = scalar_select %p104, %s105, %s106
      %p110 = pneg %p104
      %p111 = scmp.eq.s32.totalorder %s17, 3
      %p112 = por %p110, %p111
      %p113 = scmp.ne.s32.totalorder %s105, %s108
      %p114 = scmp.eq.s32.totalorder %s17, 0
      %p115 = por %p113, %p114
      %p116 = scmp.ne.s32.totalorder %s105, %s108
      %p117 = scmp.eq.s32.totalorder %s22, 3
      %p118 = por %p116, %p117
      %p119 = scmp.ne.s32.totalorder %s108, %s109
      %p120 = scmp.eq.s32.totalorder %s22, 0
      %p121 = por %p119, %p120
      %p122 = scmp.ne.s32.totalorder %s108, %s109
      %p123 = scmp.eq.s32.totalorder %s23, 3
      %p124 = por %p122, %p123
      %p126 = scmp.ne.s32.totalorder %s109, %s125
      %p127 = scmp.eq.s32.totalorder %s23, 0
      %p128 = por %p126, %p127
      %s129 = ssub.s32 %s17, %s24
      %p130 = scmp.eq.s32.totalorder %s129, 0
      %s132 = sadd.s32 %s131, 1
      %s133 = scalar_select %p130, %s131, %s132
      %p136 = pneg %p130
      %p137 = scmp.eq.s32.totalorder %s17, 3
      %p138 = por %p136, %p137
      %p139 = scmp.ne.s32.totalorder %s131, %s134
      %p140 = scmp.eq.s32.totalorder %s17, 0
      %p141 = por %p139, %p140
      %p142 = scmp.ne.s32.totalorder %s131, %s134
      %p143 = scmp.eq.s32.totalorder %s22, 3
      %p144 = por %p142, %p143
      %p145 = scmp.ne.s32.totalorder %s134, %s135
      %p146 = scmp.eq.s32.totalorder %s22, 0
      %p147 = por %p145, %p146
      %p148 = scmp.ne.s32.totalorder %s134, %s135
      %p149 = scmp.eq.s32.totalorder %s23, 3
      %p150 = por %p148, %p149
      %p152 = scmp.ne.s32.totalorder %s135, %s151
      %p153 = scmp.eq.s32.totalorder %s23, 0
      %p154 = por %p152, %p153
      %p155 = scmp.le.s32.totalorder 1, %s17
      %p156 = scmp.lt.s32.totalorder %s17, 5
      %p157 = pnand %p155, %p156
      %p158 = pneg %p157
      // Predicated region
      $region9: #{tpu_custom_call.1} parent=5 // pred_check
        _
      $region10: #{tpu_custom_call.1} parent=5 // pred_check_branch
        %160 = sbr.rel (%p157) target = $region12
      $region11: #{tpu_custom_call.1} parent=5 // pred_region
        %s161 = ssub.s32 %s17, 1
      $region12: #{tpu_custom_call.1} parent=5 // pred_fallthru
        _
      %p162 = scmp.lt.s32.totalorder %s17, 4
      // Predicated region
      $region13: #{tpu_custom_call.1} parent=5 // pred_check
        %p163 = pneg %p162
      $region14: #{tpu_custom_call.1} parent=5 // pred_check_branch
        %165 = sbr.rel (%p163) target = $region16
      $region15: #{tpu_custom_call.1} parent=5 // pred_region
        // Predicated region
        $region17: #{tpu_custom_call.1} parent=15 // pred_check
          %p166 = pneg %p37
        $region18: #{tpu_custom_call.1} parent=15 // pred_check_branch
          %168 = sbr.rel (%p166) target = $region20
        $region19: #{tpu_custom_call.1} parent=15 // pred_region
          %s169 = smul.u32 8, %s17
          %p170 = scmp.lt.s32.totalorder %s169, 31
          %s171 = scalar_select %p170, %s169, 31
          %s172 = smul.addr %s171, 8
          %s173 = scalar_lea.vmem %s0, %s172
          %s174 = smul.u32 8, %s17
        $region20: #{tpu_custom_call.1} parent=15 // pred_fallthru
          _
        // Predicated region
        $region21: #{tpu_custom_call.1} parent=15 // pred_check
          %p175 = pneg %p63
        $region22: #{tpu_custom_call.1} parent=15 // pred_check_branch
          %177 = sbr.rel (%p175) target = $region24
        $region23: #{tpu_custom_call.1} parent=15 // pred_region
          %s178 = sand.u32 %s53, 1
          %s179 = scalar_lea.sflag [#allocation3], %s178
          %s180 = sand.u32 %s53, 1
          %s181 = smul.addr %s180, 128
          %s182 = scalar_lea.vmem [#allocation2], %s181
          %s183 = smul.u32 8, %s17
          %185 = vsyncadd %s179, 0
          %s186 = smul.addr %s183, 2
          %s187 = smul.addr %s186, 8
          %s188 = scalar_lea.hbm %s1, %s187
          %s189 = sshll.u32 %s188, 4
          %s190 = int_to_ptr.hbm [resolvable:$true] %s189
          %s191 = sshll.u32 %s182, 4
          %s192 = int_to_ptr.vmem [resolvable:$true] %s191
          %197 = dma.hbm_to_vmem [thread:$0]  %s190, 2048, %s192, %s179, 256, 256, 16
        $region24: #{tpu_custom_call.1} parent=15 // pred_fallthru
          _
        // Predicated region
        $region25: #{tpu_custom_call.1} parent=15 // pred_check
          %p198 = pneg %p89
        $region26: #{tpu_custom_call.1} parent=15 // pred_check_branch
          %200 = sbr.rel (%p198) target = $region28
        $region27: #{tpu_custom_call.1} parent=15 // pred_region
          %s201 = sand.u32 %s79, 1
          %s202 = scalar_lea.sflag [#allocation5], %s201
          %s203 = sand.u32 %s79, 1
          %s204 = smul.addr %s203, 128
          %s205 = scalar_lea.vmem [#allocation4], %s204
          %s206 = smul.u32 8, %s17
          %208 = vsyncadd %s202, 0
          %s209 = smul.addr %s206, 2
          %s210 = smul.addr %s209, 8
          %s211 = scalar_lea.hbm %s2, %s210
          %s212 = sshll.u32 %s211, 4
          %s213 = int_to_ptr.hbm [resolvable:$true] %s212
          %s214 = sshll.u32 %s205, 4
          %s215 = int_to_ptr.vmem [resolvable:$true] %s214
          %220 = dma.hbm_to_vmem [thread:$0]  %s213, 2048, %s215, %s202, 256, 256, 16
        $region28: #{tpu_custom_call.1} parent=15 // pred_fallthru
          _
      $region16: #{tpu_custom_call.1} parent=5 // pred_fallthru
        _
      %p221 = scmp.le.s32.totalorder 1, %s17
      %p222 = scmp.lt.s32.totalorder %s17, 5
      %p223 = pnand %p221, %p222
      %p224 = pneg %p223
      // Predicated region
      $region29: #{tpu_custom_call.1} parent=5 // pred_check
        _
      $region30: #{tpu_custom_call.1} parent=5 // pred_check_branch
        %226 = sbr.rel (%p223) target = $region32
      $region31: #{tpu_custom_call.1} parent=5 // pred_region
        %s227 = ssub.s32 %s17, 1
        %s228 = sand.u32 %s56, 1
        %s229 = scalar_lea.sflag [#allocation3], %s228
        %s230 = sand.u32 %s56, 1
        %s231 = smul.addr %s230, 128
        %s232 = scalar_lea.vmem [#allocation2], %s231
        // Predicated region
        $region33: #{tpu_custom_call.1} parent=31 // pred_check
          %p233 = pneg %p69
        $region34: #{tpu_custom_call.1} parent=31 // pred_check_branch
          %235 = sbr.rel (%p233) target = $region36
        $region35: #{tpu_custom_call.1} parent=31 // pred_region
          %237 = dma.done %s229, 2048
        $region36: #{tpu_custom_call.1} parent=31 // pred_fallthru
          _
        %s238 = sand.u32 %s82, 1
        %s239 = scalar_lea.sflag [#allocation5], %s238
        %s240 = sand.u32 %s82, 1
        %s241 = smul.addr %s240, 128
        %s242 = scalar_lea.vmem [#allocation4], %s241
        // Predicated region
        $region37: #{tpu_custom_call.1} parent=31 // pred_check
          %p243 = pneg %p95
        $region38: #{tpu_custom_call.1} parent=31 // pred_check_branch
          %245 = sbr.rel (%p243) target = $region40
        $region39: #{tpu_custom_call.1} parent=31 // pred_region
          %247 = dma.done %s239, 2048
        $region40: #{tpu_custom_call.1} parent=31 // pred_fallthru
          _
        %s248 = smul.u32 8, %s22
        %p249 = scmp.lt.s32.totalorder %s248, 31
        %s250 = scalar_select %p249, %s248, 31
        %s251 = smul.addr %s250, 8
        %s252 = scalar_lea.vmem %s0, %s251
        %p253 = pneg %p43
        %p254 = pneg %p40
        %s255 = sand.u32 %s56, 1
        %s256 = scalar_lea.sflag [#allocation3], %s255
        %s257 = sand.u32 %s56, 1
        %s258 = smul.addr %s257, 128
        %s259 = scalar_lea.vmem [#allocation2], %s258
        %p260 = pneg %p69
        %p261 = pneg %p66
        %s262 = sand.u32 %s82, 1
        %s263 = scalar_lea.sflag [#allocation5], %s262
        %s264 = sand.u32 %s82, 1
        %s265 = smul.addr %s264, 128
        %s266 = scalar_lea.vmem [#allocation4], %s265
        %p267 = pneg %p95
        %p268 = pneg %p92
        %p269 = pneg %p121
        %p270 = pneg %p118
        %s271 = smul.u32 8, %s22
        %p272 = scmp.lt.s32.totalorder %s271, 31
        %s273 = scalar_select %p272, %s271, 31
        %s274 = smul.addr %s273, 8
        %s275 = scalar_lea.vmem %s3, %s274
        %p276 = pneg %p147
        %p277 = pneg %p144
        %s278 = smul.u32 8, %s22
        %p279 = scmp.lt.s32.totalorder %s278, 31
        %s280 = scalar_select %p279, %s278, 31
        %s281 = smul.addr %s280, 8
        %s282 = scalar_lea.vmem %s4, %s281
        %s283 = smul.u32 8, %s22
        %p284 = scmp.lt.s32.totalorder %s283, 31
        %s285 = scalar_select %p284, %s283, 31
        %s286 = smul.addr %s285, 8
        %s287 = scalar_lea.vmem %s0, %s286
        %s288 = smul.u32 8, %s22
        %s289 = smul.u32 8, %s22
        %s290 = smul.u32 8, %s22
        %s291 = smul.u32 8, %s22
        %p292 = scmp.lt.s32.totalorder %s291, 31
        %s293 = scalar_select %p292, %s291, 31
        %s294 = smul.addr %s293, 8
        %s295 = scalar_lea.vmem %s3, %s294
        %s296 = smul.u32 8, %s22
        %s297 = smul.u32 8, %s22
        %p298 = scmp.lt.s32.totalorder %s297, 31
        %s299 = scalar_select %p298, %s297, 31
        %s300 = smul.addr %s299, 8
        %s301 = scalar_lea.vmem %s4, %s300
        %s302 = smul.u32 8, %s22
        %v303 = vld [vmem:[%s287] sm:$0xff]
        %v304 = vld [vmem:[%s287 + $0x8] sm:$0xff]
        %v305 = vld [vmem:[%s287 + $0x10] sm:$0xff]
        %v306 = vld [vmem:[%s287 + $0x18] sm:$0xff]
        %v307 = vld [vmem:[%s287 + $0x20] sm:$0xff]
        %v308 = vld [vmem:[%s287 + $0x28] sm:$0xff]
        %v309 = vld [vmem:[%s287 + $0x30] sm:$0xff]
        %v310 = vld [vmem:[%s287 + $0x38] sm:$0xff]
        %s311 = smul.u32 0, 2
        %s312 = smul.addr %s311, 8
        %s313 = scalar_lea.vmem %s232, %s312 [#allocation2]
        %v314 = vld [vmem:[%s313] sm:$0xff]
        %v315 = vld [vmem:[%s313 + $0x10] sm:$0xff]
        %v316 = vld [vmem:[%s313 + $0x20] sm:$0xff]
        %v317 = vld [vmem:[%s313 + $0x30] sm:$0xff]
        %v318 = vld [vmem:[%s313 + $0x40] sm:$0xff]
        %v319 = vld [vmem:[%s313 + $0x50] sm:$0xff]
        %v320 = vld [vmem:[%s313 + $0x60] sm:$0xff]
        %v321 = vld [vmem:[%s313 + $0x70] sm:$0xff]
        %v322 = vmul.f32 %v303, %v314
        %v323 = vmul.f32 %v304, %v315
        %v324 = vmul.f32 %v305, %v316
        %v325 = vmul.f32 %v306, %v317
        %v326 = vmul.f32 %v307, %v318
        %v327 = vmul.f32 %v308, %v319
        %v328 = vmul.f32 %v309, %v320
        %v329 = vmul.f32 %v310, %v321
        %vm330 = vcmask 261120
        %v331 = vsel %vm330, %v322, 0.0
        %332 = vadd.xlane.f32.xlu0 %v331
        %v333 = vpop.xlane.xlu0 %332
        %v334 = vsel %vm330, %v323, 0.0
        %335 = vadd.xlane.f32.xlu0 %v334
        %v336 = vpop.xlane.xlu0 %335
        %v337 = vsel %vm330, %v324, 0.0
        %338 = vadd.xlane.f32.xlu0 %v337
        %v339 = vpop.xlane.xlu0 %338
        %v340 = vsel %vm330, %v325, 0.0
        %341 = vadd.xlane.f32.xlu0 %v340
        %v342 = vpop.xlane.xlu0 %341
        %v343 = vsel %vm330, %v326, 0.0
        %344 = vadd.xlane.f32.xlu0 %v343
        %v345 = vpop.xlane.xlu0 %344
        %v346 = vsel %vm330, %v327, 0.0
        %347 = vadd.xlane.f32.xlu0 %v346
        %v348 = vpop.xlane.xlu0 %347
        %v349 = vsel %vm330, %v328, 0.0
        %350 = vadd.xlane.f32.xlu0 %v349
        %v351 = vpop.xlane.xlu0 %350
        %v352 = vsel %vm330, %v329, 0.0
        %353 = vadd.xlane.f32.xlu0 %v352
        %v354 = vpop.xlane.xlu0 %353
        %363 = vrot.lane.b32.xlu0 %v314, 96
        %v364 = vpop.permute.xlu0 %363
        %365 = vrot.lane.b32.xlu0 %v315, 96
        %v366 = vpop.permute.xlu0 %365
        %367 = vrot.lane.b32.xlu0 %v316, 96
        %v368 = vpop.permute.xlu0 %367
        %369 = vrot.lane.b32.xlu0 %v317, 96
        %v370 = vpop.permute.xlu0 %369
        %371 = vrot.lane.b32.xlu0 %v318, 96
        %v372 = vpop.permute.xlu0 %371
        %373 = vrot.lane.b32.xlu0 %v319, 96
        %v374 = vpop.permute.xlu0 %373
        %375 = vrot.lane.b32.xlu0 %v320, 96
        %v376 = vpop.permute.xlu0 %375
        %377 = vrot.lane.b32.xlu0 %v321, 96
        %v378 = vpop.permute.xlu0 %377
        %v387 = vmul.f32 %v303, %v364
        %v388 = vmul.f32 %v304, %v366
        %v389 = vmul.f32 %v305, %v368
        %v390 = vmul.f32 %v306, %v370
        %v391 = vmul.f32 %v307, %v372
        %v392 = vmul.f32 %v308, %v374
        %v393 = vmul.f32 %v309, %v376
        %v394 = vmul.f32 %v310, %v378
        %v395 = vsel %vm330, %v387, 0.0
        %396 = vadd.xlane.f32.xlu0 %v395
        %v397 = vpop.xlane.xlu0 %396
        %v398 = vsel %vm330, %v388, 0.0
        %399 = vadd.xlane.f32.xlu0 %v398
        %v400 = vpop.xlane.xlu0 %399
        %v401 = vsel %vm330, %v389, 0.0
        %402 = vadd.xlane.f32.xlu0 %v401
        %v403 = vpop.xlane.xlu0 %402
        %v404 = vsel %vm330, %v390, 0.0
        %405 = vadd.xlane.f32.xlu0 %v404
        %v406 = vpop.xlane.xlu0 %405
        %v407 = vsel %vm330, %v391, 0.0
        %408 = vadd.xlane.f32.xlu0 %v407
        %v409 = vpop.xlane.xlu0 %408
        %v410 = vsel %vm330, %v392, 0.0
        %411 = vadd.xlane.f32.xlu0 %v410
        %v412 = vpop.xlane.xlu0 %411
        %v413 = vsel %vm330, %v393, 0.0
        %414 = vadd.xlane.f32.xlu0 %v413
        %v415 = vpop.xlane.xlu0 %414
        %v416 = vsel %vm330, %v394, 0.0
        %417 = vadd.xlane.f32.xlu0 %v416
        %v418 = vpop.xlane.xlu0 %417
        %419 = vrot.lane.b32.xlu0 %v314, 64
        %v420 = vpop.permute.xlu0 %419
        %421 = vrot.lane.b32.xlu0 %v315, 64
        %v422 = vpop.permute.xlu0 %421
        %423 = vrot.lane.b32.xlu0 %v316, 64
        %v424 = vpop.permute.xlu0 %423
        %425 = vrot.lane.b32.xlu0 %v317, 64
        %v426 = vpop.permute.xlu0 %425
        %427 = vrot.lane.b32.xlu0 %v318, 64
        %v428 = vpop.permute.xlu0 %427
        %429 = vrot.lane.b32.xlu0 %v319, 64
        %v430 = vpop.permute.xlu0 %429
        %431 = vrot.lane.b32.xlu0 %v320, 64
        %v432 = vpop.permute.xlu0 %431
        %433 = vrot.lane.b32.xlu0 %v321, 64
        %v434 = vpop.permute.xlu0 %433
        %v443 = vmul.f32 %v303, %v420
        %v444 = vmul.f32 %v304, %v422
        %v445 = vmul.f32 %v305, %v424
        %v446 = vmul.f32 %v306, %v426
        %v447 = vmul.f32 %v307, %v428
        %v448 = vmul.f32 %v308, %v430
        %v449 = vmul.f32 %v309, %v432
        %v450 = vmul.f32 %v310, %v434
        %v451 = vsel %vm330, %v443, 0.0
        %452 = vadd.xlane.f32.xlu0 %v451
        %v453 = vpop.xlane.xlu0 %452
        %v454 = vsel %vm330, %v444, 0.0
        %455 = vadd.xlane.f32.xlu0 %v454
        %v456 = vpop.xlane.xlu0 %455
        %v457 = vsel %vm330, %v445, 0.0
        %458 = vadd.xlane.f32.xlu0 %v457
        %v459 = vpop.xlane.xlu0 %458
        %v460 = vsel %vm330, %v446, 0.0
        %461 = vadd.xlane.f32.xlu0 %v460
        %v462 = vpop.xlane.xlu0 %461
        %v463 = vsel %vm330, %v447, 0.0
        %464 = vadd.xlane.f32.xlu0 %v463
        %v465 = vpop.xlane.xlu0 %464
        %v466 = vsel %vm330, %v448, 0.0
        %467 = vadd.xlane.f32.xlu0 %v466
        %v468 = vpop.xlane.xlu0 %467
        %v469 = vsel %vm330, %v449, 0.0
        %470 = vadd.xlane.f32.xlu0 %v469
        %v471 = vpop.xlane.xlu0 %470
        %v472 = vsel %vm330, %v450, 0.0
        %473 = vadd.xlane.f32.xlu0 %v472
        %v474 = vpop.xlane.xlu0 %473
        %475 = vrot.lane.b32.xlu0 %v314, 32
        %v476 = vpop.permute.xlu0 %475
        %477 = vrot.lane.b32.xlu0 %v315, 32
        %v478 = vpop.permute.xlu0 %477
        %479 = vrot.lane.b32.xlu0 %v316, 32
        %v480 = vpop.permute.xlu0 %479
        %481 = vrot.lane.b32.xlu0 %v317, 32
        %v482 = vpop.permute.xlu0 %481
        %483 = vrot.lane.b32.xlu0 %v318, 32
        %v484 = vpop.permute.xlu0 %483
        %485 = vrot.lane.b32.xlu0 %v319, 32
        %v486 = vpop.permute.xlu0 %485
        %487 = vrot.lane.b32.xlu0 %v320, 32
        %v488 = vpop.permute.xlu0 %487
        %489 = vrot.lane.b32.xlu0 %v321, 32
        %v490 = vpop.permute.xlu0 %489
        %v499 = vmul.f32 %v303, %v476
        %v500 = vmul.f32 %v304, %v478
        %v501 = vmul.f32 %v305, %v480
        %v502 = vmul.f32 %v306, %v482
        %v503 = vmul.f32 %v307, %v484
        %v504 = vmul.f32 %v308, %v486
        %v505 = vmul.f32 %v309, %v488
        %v506 = vmul.f32 %v310, %v490
        %v507 = vsel %vm330, %v499, 0.0
        %508 = vadd.xlane.f32.xlu0 %v507
        %v509 = vpop.xlane.xlu0 %508
        %v510 = vsel %vm330, %v500, 0.0
        %511 = vadd.xlane.f32.xlu0 %v510
        %v512 = vpop.xlane.xlu0 %511
        %v513 = vsel %vm330, %v501, 0.0
        %514 = vadd.xlane.f32.xlu0 %v513
        %v515 = vpop.xlane.xlu0 %514
        %v516 = vsel %vm330, %v502, 0.0
        %517 = vadd.xlane.f32.xlu0 %v516
        %v518 = vpop.xlane.xlu0 %517
        %v519 = vsel %vm330, %v503, 0.0
        %520 = vadd.xlane.f32.xlu0 %v519
        %v521 = vpop.xlane.xlu0 %520
        %v522 = vsel %vm330, %v504, 0.0
        %523 = vadd.xlane.f32.xlu0 %v522
        %v524 = vpop.xlane.xlu0 %523
        %v525 = vsel %vm330, %v505, 0.0
        %526 = vadd.xlane.f32.xlu0 %v525
        %v527 = vpop.xlane.xlu0 %526
        %v528 = vsel %vm330, %v506, 0.0
        %529 = vadd.xlane.f32.xlu0 %v528
        %v530 = vpop.xlane.xlu0 %529
        %v531 = vld [vmem:[%s313 + $0x8] sm:$0xff]
        %v532 = vld [vmem:[%s313 + $0x18] sm:$0xff]
        %v533 = vld [vmem:[%s313 + $0x28] sm:$0xff]
        %v534 = vld [vmem:[%s313 + $0x38] sm:$0xff]
        %v535 = vld [vmem:[%s313 + $0x48] sm:$0xff]
        %v536 = vld [vmem:[%s313 + $0x58] sm:$0xff]
        %v537 = vld [vmem:[%s313 + $0x68] sm:$0xff]
        %v538 = vld [vmem:[%s313 + $0x78] sm:$0xff]
        %v539 = vmul.f32 %v303, %v531
        %v540 = vmul.f32 %v304, %v532
        %v541 = vmul.f32 %v305, %v533
        %v542 = vmul.f32 %v306, %v534
        %v543 = vmul.f32 %v307, %v535
        %v544 = vmul.f32 %v308, %v536
        %v545 = vmul.f32 %v309, %v537
        %v546 = vmul.f32 %v310, %v538
        %v547 = vsel %vm330, %v539, 0.0
        %548 = vadd.xlane.f32.xlu0 %v547
        %v549 = vpop.xlane.xlu0 %548
        %v550 = vsel %vm330, %v540, 0.0
        %551 = vadd.xlane.f32.xlu0 %v550
        %v552 = vpop.xlane.xlu0 %551
        %v553 = vsel %vm330, %v541, 0.0
        %554 = vadd.xlane.f32.xlu0 %v553
        %v555 = vpop.xlane.xlu0 %554
        %v556 = vsel %vm330, %v542, 0.0
        %557 = vadd.xlane.f32.xlu0 %v556
        %v558 = vpop.xlane.xlu0 %557
        %v559 = vsel %vm330, %v543, 0.0
        %560 = vadd.xlane.f32.xlu0 %v559
        %v561 = vpop.xlane.xlu0 %560
        %v562 = vsel %vm330, %v544, 0.0
        %563 = vadd.xlane.f32.xlu0 %v562
        %v564 = vpop.xlane.xlu0 %563
        %v565 = vsel %vm330, %v545, 0.0
        %566 = vadd.xlane.f32.xlu0 %v565
        %v567 = vpop.xlane.xlu0 %566
        %v568 = vsel %vm330, %v546, 0.0
        %569 = vadd.xlane.f32.xlu0 %v568
        %v570 = vpop.xlane.xlu0 %569
        %579 = vrot.lane.b32.xlu0 %v531, 96
        %v580 = vpop.permute.xlu0 %579
        %581 = vrot.lane.b32.xlu0 %v532, 96
        %v582 = vpop.permute.xlu0 %581
        %583 = vrot.lane.b32.xlu0 %v533, 96
        %v584 = vpop.permute.xlu0 %583
        %585 = vrot.lane.b32.xlu0 %v534, 96
        %v586 = vpop.permute.xlu0 %585
        %587 = vrot.lane.b32.xlu0 %v535, 96
        %v588 = vpop.permute.xlu0 %587
        %589 = vrot.lane.b32.xlu0 %v536, 96
        %v590 = vpop.permute.xlu0 %589
        %591 = vrot.lane.b32.xlu0 %v537, 96
        %v592 = vpop.permute.xlu0 %591
        %593 = vrot.lane.b32.xlu0 %v538, 96
        %v594 = vpop.permute.xlu0 %593
        %v603 = vmul.f32 %v303, %v580
        %v604 = vmul.f32 %v304, %v582
        %v605 = vmul.f32 %v305, %v584
        %v606 = vmul.f32 %v306, %v586
        %v607 = vmul.f32 %v307, %v588
        %v608 = vmul.f32 %v308, %v590
        %v609 = vmul.f32 %v309, %v592
        %v610 = vmul.f32 %v310, %v594
        %v611 = vsel %vm330, %v603, 0.0
        %612 = vadd.xlane.f32.xlu0 %v611
        %v613 = vpop.xlane.xlu0 %612
        %v614 = vsel %vm330, %v604, 0.0
        %615 = vadd.xlane.f32.xlu0 %v614
        %v616 = vpop.xlane.xlu0 %615
        %v617 = vsel %vm330, %v605, 0.0
        %618 = vadd.xlane.f32.xlu0 %v617
        %v619 = vpop.xlane.xlu0 %618
        %v620 = vsel %vm330, %v606, 0.0
        %621 = vadd.xlane.f32.xlu0 %v620
        %v622 = vpop.xlane.xlu0 %621
        %v623 = vsel %vm330, %v607, 0.0
        %624 = vadd.xlane.f32.xlu0 %v623
        %v625 = vpop.xlane.xlu0 %624
        %v626 = vsel %vm330, %v608, 0.0
        %627 = vadd.xlane.f32.xlu0 %v626
        %v628 = vpop.xlane.xlu0 %627
        %v629 = vsel %vm330, %v609, 0.0
        %630 = vadd.xlane.f32.xlu0 %v629
        %v631 = vpop.xlane.xlu0 %630
        %v632 = vsel %vm330, %v610, 0.0
        %633 = vadd.xlane.f32.xlu0 %v632
        %v634 = vpop.xlane.xlu0 %633
        %635 = vrot.lane.b32.xlu0 %v531, 64
        %v636 = vpop.permute.xlu0 %635
        %637 = vrot.lane.b32.xlu0 %v532, 64
        %v638 = vpop.permute.xlu0 %637
        %639 = vrot.lane.b32.xlu0 %v533, 64
        %v640 = vpop.permute.xlu0 %639
        %641 = vrot.lane.b32.xlu0 %v534, 64
        %v642 = vpop.permute.xlu0 %641
        %643 = vrot.lane.b32.xlu0 %v535, 64
        %v644 = vpop.permute.xlu0 %643
        %645 = vrot.lane.b32.xlu0 %v536, 64
        %v646 = vpop.permute.xlu0 %645
        %647 = vrot.lane.b32.xlu0 %v537, 64
        %v648 = vpop.permute.xlu0 %647
        %649 = vrot.lane.b32.xlu0 %v538, 64
        %v650 = vpop.permute.xlu0 %649
        %v659 = vmul.f32 %v303, %v636
        %v660 = vmul.f32 %v304, %v638
        %v661 = vmul.f32 %v305, %v640
        %v662 = vmul.f32 %v306, %v642
        %v663 = vmul.f32 %v307, %v644
        %v664 = vmul.f32 %v308, %v646
        %v665 = vmul.f32 %v309, %v648
        %v666 = vmul.f32 %v310, %v650
        %v667 = vsel %vm330, %v659, 0.0
        %668 = vadd.xlane.f32.xlu0 %v667
        %v669 = vpop.xlane.xlu0 %668
        %v670 = vsel %vm330, %v660, 0.0
        %671 = vadd.xlane.f32.xlu0 %v670
        %v672 = vpop.xlane.xlu0 %671
        %v673 = vsel %vm330, %v661, 0.0
        %674 = vadd.xlane.f32.xlu0 %v673
        %v675 = vpop.xlane.xlu0 %674
        %v676 = vsel %vm330, %v662, 0.0
        %677 = vadd.xlane.f32.xlu0 %v676
        %v678 = vpop.xlane.xlu0 %677
        %v679 = vsel %vm330, %v663, 0.0
        %680 = vadd.xlane.f32.xlu0 %v679
        %v681 = vpop.xlane.xlu0 %680
        %v682 = vsel %vm330, %v664, 0.0
        %683 = vadd.xlane.f32.xlu0 %v682
        %v684 = vpop.xlane.xlu0 %683
        %v685 = vsel %vm330, %v665, 0.0
        %686 = vadd.xlane.f32.xlu0 %v685
        %v687 = vpop.xlane.xlu0 %686
        %v688 = vsel %vm330, %v666, 0.0
        %689 = vadd.xlane.f32.xlu0 %v688
        %v690 = vpop.xlane.xlu0 %689
        %691 = vrot.lane.b32.xlu0 %v531, 32
        %v692 = vpop.permute.xlu0 %691
        %693 = vrot.lane.b32.xlu0 %v532, 32
        %v694 = vpop.permute.xlu0 %693
        %695 = vrot.lane.b32.xlu0 %v533, 32
        %v696 = vpop.permute.xlu0 %695
        %697 = vrot.lane.b32.xlu0 %v534, 32
        %v698 = vpop.permute.xlu0 %697
        %699 = vrot.lane.b32.xlu0 %v535, 32
        %v700 = vpop.permute.xlu0 %699
        %701 = vrot.lane.b32.xlu0 %v536, 32
        %v702 = vpop.permute.xlu0 %701
        %703 = vrot.lane.b32.xlu0 %v537, 32
        %v704 = vpop.permute.xlu0 %703
        %705 = vrot.lane.b32.xlu0 %v538, 32
        %v706 = vpop.permute.xlu0 %705
        %v715 = vmul.f32 %v303, %v692
        %v716 = vmul.f32 %v304, %v694
        %v717 = vmul.f32 %v305, %v696
        %v718 = vmul.f32 %v306, %v698
        %v719 = vmul.f32 %v307, %v700
        %v720 = vmul.f32 %v308, %v702
        %v721 = vmul.f32 %v309, %v704
        %v722 = vmul.f32 %v310, %v706
        %v723 = vsel %vm330, %v715, 0.0
        %724 = vadd.xlane.f32.xlu0 %v723
        %v725 = vpop.xlane.xlu0 %724
        %v726 = vsel %vm330, %v716, 0.0
        %727 = vadd.xlane.f32.xlu0 %v726
        %v728 = vpop.xlane.xlu0 %727
        %v729 = vsel %vm330, %v717, 0.0
        %730 = vadd.xlane.f32.xlu0 %v729
        %v731 = vpop.xlane.xlu0 %730
        %v732 = vsel %vm330, %v718, 0.0
        %733 = vadd.xlane.f32.xlu0 %v732
        %v734 = vpop.xlane.xlu0 %733
        %v735 = vsel %vm330, %v719, 0.0
        %736 = vadd.xlane.f32.xlu0 %v735
        %v737 = vpop.xlane.xlu0 %736
        %v738 = vsel %vm330, %v720, 0.0
        %739 = vadd.xlane.f32.xlu0 %v738
        %v740 = vpop.xlane.xlu0 %739
        %v741 = vsel %vm330, %v721, 0.0
        %742 = vadd.xlane.f32.xlu0 %v741
        %v743 = vpop.xlane.xlu0 %742
        %v744 = vsel %vm330, %v722, 0.0
        %745 = vadd.xlane.f32.xlu0 %v744
        %v746 = vpop.xlane.xlu0 %745
        %vm747 = vcmask 7168
        %v748 = vsel %vm747, %v333, %v397
        %v749 = vsel %vm747, %v336, %v400
        %v750 = vsel %vm747, %v339, %v403
        %v751 = vsel %vm747, %v342, %v406
        %v752 = vsel %vm747, %v345, %v409
        %v753 = vsel %vm747, %v348, %v412
        %v754 = vsel %vm747, %v351, %v415
        %v755 = vsel %vm747, %v354, %v418
        %vm756 = vcmask 15360
        %v757 = vsel %vm756, %v748, %v453
        %v758 = vsel %vm756, %v749, %v456
        %v759 = vsel %vm756, %v750, %v459
        %v760 = vsel %vm756, %v751, %v462
        %v761 = vsel %vm756, %v752, %v465
        %v762 = vsel %vm756, %v753, %v468
        %v763 = vsel %vm756, %v754, %v471
        %v764 = vsel %vm756, %v755, %v474
        %vm765 = vcmask 23552
        %v766 = vsel %vm765, %v757, %v509
        %v767 = vsel %vm765, %v758, %v512
        %v768 = vsel %vm765, %v759, %v515
        %v769 = vsel %vm765, %v760, %v518
        %v770 = vsel %vm765, %v761, %v521
        %v771 = vsel %vm765, %v762, %v524
        %v772 = vsel %vm765, %v763, %v527
        %v773 = vsel %vm765, %v764, %v530
        %vm774 = vcmask 31744
        %v775 = vsel %vm774, %v766, %v549
        %v776 = vsel %vm774, %v767, %v552
        %v777 = vsel %vm774, %v768, %v555
        %v778 = vsel %vm774, %v769, %v558
        %v779 = vsel %vm774, %v770, %v561
        %v780 = vsel %vm774, %v771, %v564
        %v781 = vsel %vm774, %v772, %v567
        %v782 = vsel %vm774, %v773, %v570
        %vm783 = vcmask 39936
        %v784 = vsel %vm783, %v775, %v613
        %v785 = vsel %vm783, %v776, %v616
        %v786 = vsel %vm783, %v777, %v619
        %v787 = vsel %vm783, %v778, %v622
        %v788 = vsel %vm783, %v779, %v625
        %v789 = vsel %vm783, %v780, %v628
        %v790 = vsel %vm783, %v781, %v631
        %v791 = vsel %vm783, %v782, %v634
        %vm792 = vcmask 48128
        %v793 = vsel %vm792, %v784, %v669
        %v794 = vsel %vm792, %v785, %v672
        %v795 = vsel %vm792, %v786, %v675
        %v796 = vsel %vm792, %v787, %v678
        %v797 = vsel %vm792, %v788, %v681
        %v798 = vsel %vm792, %v789, %v684
        %v799 = vsel %vm792, %v790, %v687
        %v800 = vsel %vm792, %v791, %v690
        %vm801 = vcmask 56320
        %v802 = vsel %vm801, %v793, %v725
        %v803 = vsel %vm801, %v794, %v728
        %v804 = vsel %vm801, %v795, %v731
        %v805 = vsel %vm801, %v796, %v734
        %v806 = vsel %vm801, %v797, %v737
        %v807 = vsel %vm801, %v798, %v740
        %v808 = vsel %vm801, %v799, %v743
        %v809 = vsel %vm801, %v800, %v746
        %v810 = vmul.f32 %v802, 0.17677669
        %v811 = vmul.f32 %v803, 0.17677669
        %v812 = vmul.f32 %v804, 0.17677669
        %v813 = vmul.f32 %v805, 0.17677669
        %v814 = vmul.f32 %v806, 0.17677669
        %v815 = vmul.f32 %v807, 0.17677669
        %v816 = vmul.f32 %v808, 0.17677669
        %v817 = vmul.f32 %v809, 0.17677669
        %vm818 = vcmask 64512
        %v819 = vsel %vm818, %v810, -inf
        %820 = vmax.xlane.f32.xlu0 %v819
        %v821 = vpop.xlane.xlu0 %820
        %v822 = vsel %vm818, %v811, -inf
        %823 = vmax.xlane.f32.xlu0 %v822
        %v824 = vpop.xlane.xlu0 %823
        %v825 = vsel %vm818, %v812, -inf
        %826 = vmax.xlane.f32.xlu0 %v825
        %v827 = vpop.xlane.xlu0 %826
        %v828 = vsel %vm818, %v813, -inf
        %829 = vmax.xlane.f32.xlu0 %v828
        %v830 = vpop.xlane.xlu0 %829
        %v831 = vsel %vm818, %v814, -inf
        %832 = vmax.xlane.f32.xlu0 %v831
        %v833 = vpop.xlane.xlu0 %832
        %v834 = vsel %vm818, %v815, -inf
        %835 = vmax.xlane.f32.xlu0 %v834
        %v836 = vpop.xlane.xlu0 %835
        %v837 = vsel %vm818, %v816, -inf
        %838 = vmax.xlane.f32.xlu0 %v837
        %v839 = vpop.xlane.xlu0 %838
        %v840 = vsel %vm818, %v817, -inf
        %841 = vmax.xlane.f32.xlu0 %v840
        %v842 = vpop.xlane.xlu0 %841
        %v843 = vsub.f32 %v810, %v821
        %v844 = vsub.f32 %v811, %v824
        %v845 = vsub.f32 %v812, %v827
        %v846 = vsub.f32 %v813, %v830
        %v847 = vsub.f32 %v814, %v833
        %v848 = vsub.f32 %v815, %v836
        %v849 = vsub.f32 %v816, %v839
        %v850 = vsub.f32 %v817, %v842
        %v851 = vmul.f32 %v843, 1.442695
        %v852 = vpow.pop %v851
        %v853 = vmul.f32 %v844, 1.442695
        %v854 = vpow.pop %v853
        %v855 = vmul.f32 %v845, 1.442695
        %v856 = vpow.pop %v855
        %v857 = vmul.f32 %v846, 1.442695
        %v858 = vpow.pop %v857
        %v859 = vmul.f32 %v847, 1.442695
        %v860 = vpow.pop %v859
        %v861 = vmul.f32 %v848, 1.442695
        %v862 = vpow.pop %v861
        %v863 = vmul.f32 %v849, 1.442695
        %v864 = vpow.pop %v863
        %v865 = vmul.f32 %v850, 1.442695
        %v866 = vpow.pop %v865
        %v867 = vsel %vm818, %v852, 0.0
        %868 = vadd.xlane.f32.xlu0 %v867
        %v869 = vpop.xlane.xlu0 %868
        %v870 = vsel %vm818, %v854, 0.0
        %871 = vadd.xlane.f32.xlu0 %v870
        %v872 = vpop.xlane.xlu0 %871
        %v873 = vsel %vm818, %v856, 0.0
        %874 = vadd.xlane.f32.xlu0 %v873
        %v875 = vpop.xlane.xlu0 %874
        %v876 = vsel %vm818, %v858, 0.0
        %877 = vadd.xlane.f32.xlu0 %v876
        %v878 = vpop.xlane.xlu0 %877
        %v879 = vsel %vm818, %v860, 0.0
        %880 = vadd.xlane.f32.xlu0 %v879
        %v881 = vpop.xlane.xlu0 %880
        %v882 = vsel %vm818, %v862, 0.0
        %883 = vadd.xlane.f32.xlu0 %v882
        %v884 = vpop.xlane.xlu0 %883
        %v885 = vsel %vm818, %v864, 0.0
        %886 = vadd.xlane.f32.xlu0 %v885
        %v887 = vpop.xlane.xlu0 %886
        %v888 = vsel %vm818, %v866, 0.0
        %889 = vadd.xlane.f32.xlu0 %v888
        %v890 = vpop.xlane.xlu0 %889
        %v891 = vrcp.pop %v869
        %v892 = vmul.f32 %v869, %v891
        %v893 = vsub.f32 1.0, %v892
        %v894 = vmul.f32 %v891, %v893
        %v895 = vadd.f32 %v891, %v894
        %vm896 = vweird.f32 %v869
        %vm897 = vweird.f32 %v891
        %vm898 = vmor %vm896, %vm897
        %v899 = vsel %vm898, %v891, %v895
        %v900 = vand.u32 2147483647, %v869
        %vm901 = vcmp.eq.f32.partialorder %v900, 8.507059e+37
        %v902 = vand.u32 %v869, 2147483648
        %v903 = vor.u32 1.1754944e-38, %v902
        %v904 = vsel %vm901, %v903, %v899
        %v905 = vmul.f32 %v852, %v904
        %v906 = vrcp.pop %v872
        %v907 = vmul.f32 %v872, %v906
        %v908 = vsub.f32 1.0, %v907
        %v909 = vmul.f32 %v906, %v908
        %v910 = vadd.f32 %v906, %v909
        %vm911 = vweird.f32 %v872
        %vm912 = vweird.f32 %v906
        %vm913 = vmor %vm911, %vm912
        %v914 = vsel %vm913, %v906, %v910
        %v915 = vand.u32 2147483647, %v872
        %vm916 = vcmp.eq.f32.partialorder %v915, 8.507059e+37
        %v917 = vand.u32 %v872, 2147483648
        %v918 = vor.u32 1.1754944e-38, %v917
        %v919 = vsel %vm916, %v918, %v914
        %v920 = vmul.f32 %v854, %v919
        %v921 = vrcp.pop %v875
        %v922 = vmul.f32 %v875, %v921
        %v923 = vsub.f32 1.0, %v922
        %v924 = vmul.f32 %v921, %v923
        %v925 = vadd.f32 %v921, %v924
        %vm926 = vweird.f32 %v875
        %vm927 = vweird.f32 %v921
        %vm928 = vmor %vm926, %vm927
        %v929 = vsel %vm928, %v921, %v925
        %v930 = vand.u32 2147483647, %v875
        %vm931 = vcmp.eq.f32.partialorder %v930, 8.507059e+37
        %v932 = vand.u32 %v875, 2147483648
        %v933 = vor.u32 1.1754944e-38, %v932
        %v934 = vsel %vm931, %v933, %v929
        %v935 = vmul.f32 %v856, %v934
        %v936 = vrcp.pop %v878
        %v937 = vmul.f32 %v878, %v936
        %v938 = vsub.f32 1.0, %v937
        %v939 = vmul.f32 %v936, %v938
        %v940 = vadd.f32 %v936, %v939
        %vm941 = vweird.f32 %v878
        %vm942 = vweird.f32 %v936
        %vm943 = vmor %vm941, %vm942
        %v944 = vsel %vm943, %v936, %v940
        %v945 = vand.u32 2147483647, %v878
        %vm946 = vcmp.eq.f32.partialorder %v945, 8.507059e+37
        %v947 = vand.u32 %v878, 2147483648
        %v948 = vor.u32 1.1754944e-38, %v947
        %v949 = vsel %vm946, %v948, %v944
        %v950 = vmul.f32 %v858, %v949
        %v951 = vrcp.pop %v881
        %v952 = vmul.f32 %v881, %v951
        %v953 = vsub.f32 1.0, %v952
        %v954 = vmul.f32 %v951, %v953
        %v955 = vadd.f32 %v951, %v954
        %vm956 = vweird.f32 %v881
        %vm957 = vweird.f32 %v951
        %vm958 = vmor %vm956, %vm957
        %v959 = vsel %vm958, %v951, %v955
        %v960 = vand.u32 2147483647, %v881
        %vm961 = vcmp.eq.f32.partialorder %v960, 8.507059e+37
        %v962 = vand.u32 %v881, 2147483648
        %v963 = vor.u32 1.1754944e-38, %v962
        %v964 = vsel %vm961, %v963, %v959
        %v965 = vmul.f32 %v860, %v964
        %v966 = vrcp.pop %v884
        %v967 = vmul.f32 %v884, %v966
        %v968 = vsub.f32 1.0, %v967
        %v969 = vmul.f32 %v966, %v968
        %v970 = vadd.f32 %v966, %v969
        %vm971 = vweird.f32 %v884
        %vm972 = vweird.f32 %v966
        %vm973 = vmor %vm971, %vm972
        %v974 = vsel %vm973, %v966, %v970
        %v975 = vand.u32 2147483647, %v884
        %vm976 = vcmp.eq.f32.partialorder %v975, 8.507059e+37
        %v977 = vand.u32 %v884, 2147483648
        %v978 = vor.u32 1.1754944e-38, %v977
        %v979 = vsel %vm976, %v978, %v974
        %v980 = vmul.f32 %v862, %v979
        %v981 = vrcp.pop %v887
        %v982 = vmul.f32 %v887, %v981
        %v983 = vsub.f32 1.0, %v982
        %v984 = vmul.f32 %v981, %v983
        %v985 = vadd.f32 %v981, %v984
        %vm986 = vweird.f32 %v887
        %vm987 = vweird.f32 %v981
        %vm988 = vmor %vm986, %vm987
        %v989 = vsel %vm988, %v981, %v985
        %v990 = vand.u32 2147483647, %v887
        %vm991 = vcmp.eq.f32.partialorder %v990, 8.507059e+37
        %v992 = vand.u32 %v887, 2147483648
        %v993 = vor.u32 1.1754944e-38, %v992
        %v994 = vsel %vm991, %v993, %v989
        %v995 = vmul.f32 %v864, %v994
        %v996 = vrcp.pop %v890
        %v997 = vmul.f32 %v890, %v996
        %v998 = vsub.f32 1.0, %v997
        %v999 = vmul.f32 %v996, %v998
        %v1000 = vadd.f32 %v996, %v999
        %vm1001 = vweird.f32 %v890
        %vm1002 = vweird.f32 %v996
        %vm1003 = vmor %vm1001, %vm1002
        %v1004 = vsel %vm1003, %v996, %v1000
        %v1005 = vand.u32 2147483647, %v890
        %vm1006 = vcmp.eq.f32.partialorder %v1005, 8.507059e+37
        %v1007 = vand.u32 %v890, 2147483648
        %v1008 = vor.u32 1.1754944e-38, %v1007
        %v1009 = vsel %vm1006, %v1008, %v1004
        %v1010 = vmul.f32 %v866, %v1009
        %s1011 = smul.addr %s311, 8
        %s1012 = scalar_lea.vmem %s242, %s1011 [#allocation4]
        %v1013 = vld [vmem:[%s1012] sm:$0xff]
        %v1014 = vld [vmem:[%s1012 + $0x10] sm:$0xff]
        %v1015 = vld [vmem:[%s1012 + $0x20] sm:$0xff]
        %v1016 = vld [vmem:[%s1012 + $0x30] sm:$0xff]
        %v1017 = vld [vmem:[%s1012 + $0x40] sm:$0xff]
        %v1018 = vld [vmem:[%s1012 + $0x50] sm:$0xff]
        %v1019 = vld [vmem:[%s1012 + $0x60] sm:$0xff]
        %v1020 = vld [vmem:[%s1012 + $0x70] sm:$0xff]
        %1022 = vset.pattern.permute.xlu0 0
        %1023 = vperm.xlu0 %1022, %v905
        %v1024 = vpop.permute.xlu0 %1023
        %1027 = vset.pattern.permute.xlu0 0
        %1028 = vperm.xlu0 %1027, %v920
        %v1029 = vpop.permute.xlu0 %1028
        %1032 = vset.pattern.permute.xlu0 0
        %1033 = vperm.xlu0 %1032, %v935
        %v1034 = vpop.permute.xlu0 %1033
        %1037 = vset.pattern.permute.xlu0 0
        %1038 = vperm.xlu0 %1037, %v950
        %v1039 = vpop.permute.xlu0 %1038
        %1042 = vset.pattern.permute.xlu0 0
        %1043 = vperm.xlu0 %1042, %v965
        %v1044 = vpop.permute.xlu0 %1043
        %1047 = vset.pattern.permute.xlu0 0
        %1048 = vperm.xlu0 %1047, %v980
        %v1049 = vpop.permute.xlu0 %1048
        %1052 = vset.pattern.permute.xlu0 0
        %1053 = vperm.xlu0 %1052, %v995
        %v1054 = vpop.permute.xlu0 %1053
        %1057 = vset.pattern.permute.xlu0 0
        %1058 = vperm.xlu0 %1057, %v1010
        %v1059 = vpop.permute.xlu0 %1058
        %v1061 = vmul.f32 %v1024, %v1013
        %v1062 = vmul.f32 %v1029, %v1014
        %v1063 = vmul.f32 %v1034, %v1015
        %v1064 = vmul.f32 %v1039, %v1016
        %v1065 = vmul.f32 %v1044, %v1017
        %v1066 = vmul.f32 %v1049, %v1018
        %v1067 = vmul.f32 %v1054, %v1019
        %v1068 = vmul.f32 %v1059, %v1020
        %v1069 = vadd.f32 %v1061, 0.0
        %v1070 = vadd.f32 %v1062, 0.0
        %v1071 = vadd.f32 %v1063, 0.0
        %v1072 = vadd.f32 %v1064, 0.0
        %v1073 = vadd.f32 %v1065, 0.0
        %v1074 = vadd.f32 %v1066, 0.0
        %v1075 = vadd.f32 %v1067, 0.0
        %v1076 = vadd.f32 %v1068, 0.0
        %1077 = vset.pattern.permute.xlu0 1
        %1078 = vperm.xlu0 %1077, %v905
        %v1079 = vpop.permute.xlu0 %1078
        %1081 = vset.pattern.permute.xlu0 1
        %1082 = vperm.xlu0 %1081, %v920
        %v1083 = vpop.permute.xlu0 %1082
        %1085 = vset.pattern.permute.xlu0 1
        %1086 = vperm.xlu0 %1085, %v935
        %v1087 = vpop.permute.xlu0 %1086
        %1089 = vset.pattern.permute.xlu0 1
        %1090 = vperm.xlu0 %1089, %v950
        %v1091 = vpop.permute.xlu0 %1090
        %1093 = vset.pattern.permute.xlu0 1
        %1094 = vperm.xlu0 %1093, %v965
        %v1095 = vpop.permute.xlu0 %1094
        %1097 = vset.pattern.permute.xlu0 1
        %1098 = vperm.xlu0 %1097, %v980
        %v1099 = vpop.permute.xlu0 %1098
        %1101 = vset.pattern.permute.xlu0 1
        %1102 = vperm.xlu0 %1101, %v995
        %v1103 = vpop.permute.xlu0 %1102
        %1105 = vset.pattern.permute.xlu0 1
        %1106 = vperm.xlu0 %1105, %v1010
        %v1107 = vpop.permute.xlu0 %1106
        %v1109 = vmul.f32 %v1079, %v1013
        %v1110 = vmul.f32 %v1083, %v1014
        %v1111 = vmul.f32 %v1087, %v1015
        %v1112 = vmul.f32 %v1091, %v1016
        %v1113 = vmul.f32 %v1095, %v1017
        %v1114 = vmul.f32 %v1099, %v1018
        %v1115 = vmul.f32 %v1103, %v1019
        %v1116 = vmul.f32 %v1107, %v1020
        %1125 = vrot.lane.b32.xlu0 %v1109, 96
        %v1126 = vpop.permute.xlu0 %1125
        %1127 = vrot.lane.b32.xlu0 %v1110, 96
        %v1128 = vpop.permute.xlu0 %1127
        %1129 = vrot.lane.b32.xlu0 %v1111, 96
        %v1130 = vpop.permute.xlu0 %1129
        %1131 = vrot.lane.b32.xlu0 %v1112, 96
        %v1132 = vpop.permute.xlu0 %1131
        %1133 = vrot.lane.b32.xlu0 %v1113, 96
        %v1134 = vpop.permute.xlu0 %1133
        %1135 = vrot.lane.b32.xlu0 %v1114, 96
        %v1136 = vpop.permute.xlu0 %1135
        %1137 = vrot.lane.b32.xlu0 %v1115, 96
        %v1138 = vpop.permute.xlu0 %1137
        %1139 = vrot.lane.b32.xlu0 %v1116, 96
        %v1140 = vpop.permute.xlu0 %1139
        %v1149 = vadd.f32 %v1069, %v1126
        %v1150 = vadd.f32 %v1070, %v1128
        %v1151 = vadd.f32 %v1071, %v1130
        %v1152 = vadd.f32 %v1072, %v1132
        %v1153 = vadd.f32 %v1073, %v1134
        %v1154 = vadd.f32 %v1074, %v1136
        %v1155 = vadd.f32 %v1075, %v1138
        %v1156 = vadd.f32 %v1076, %v1140
        %1157 = vset.pattern.permute.xlu0 2
        %1158 = vperm.xlu0 %1157, %v905
        %v1159 = vpop.permute.xlu0 %1158
        %1161 = vset.pattern.permute.xlu0 2
        %1162 = vperm.xlu0 %1161, %v920
        %v1163 = vpop.permute.xlu0 %1162
        %1165 = vset.pattern.permute.xlu0 2
        %1166 = vperm.xlu0 %1165, %v935
        %v1167 = vpop.permute.xlu0 %1166
        %1169 = vset.pattern.permute.xlu0 2
        %1170 = vperm.xlu0 %1169, %v950
        %v1171 = vpop.permute.xlu0 %1170
        %1173 = vset.pattern.permute.xlu0 2
        %1174 = vperm.xlu0 %1173, %v965
        %v1175 = vpop.permute.xlu0 %1174
        %1177 = vset.pattern.permute.xlu0 2
        %1178 = vperm.xlu0 %1177, %v980
        %v1179 = vpop.permute.xlu0 %1178
        %1181 = vset.pattern.permute.xlu0 2
        %1182 = vperm.xlu0 %1181, %v995
        %v1183 = vpop.permute.xlu0 %1182
        %1185 = vset.pattern.permute.xlu0 2
        %1186 = vperm.xlu0 %1185, %v1010
        %v1187 = vpop.permute.xlu0 %1186
        %v1189 = vmul.f32 %v1159, %v1013
        %v1190 = vmul.f32 %v1163, %v1014
        %v1191 = vmul.f32 %v1167, %v1015
        %v1192 = vmul.f32 %v1171, %v1016
        %v1193 = vmul.f32 %v1175, %v1017
        %v1194 = vmul.f32 %v1179, %v1018
        %v1195 = vmul.f32 %v1183, %v1019
        %v1196 = vmul.f32 %v1187, %v1020
        %1205 = vrot.lane.b32.xlu0 %v1189, 64
        %v1206 = vpop.permute.xlu0 %1205
        %1207 = vrot.lane.b32.xlu0 %v1190, 64
        %v1208 = vpop.permute.xlu0 %1207
        %1209 = vrot.lane.b32.xlu0 %v1191, 64
        %v1210 = vpop.permute.xlu0 %1209
        %1211 = vrot.lane.b32.xlu0 %v1192, 64
        %v1212 = vpop.permute.xlu0 %1211
        %1213 = vrot.lane.b32.xlu0 %v1193, 64
        %v1214 = vpop.permute.xlu0 %1213
        %1215 = vrot.lane.b32.xlu0 %v1194, 64
        %v1216 = vpop.permute.xlu0 %1215
        %1217 = vrot.lane.b32.xlu0 %v1195, 64
        %v1218 = vpop.permute.xlu0 %1217
        %1219 = vrot.lane.b32.xlu0 %v1196, 64
        %v1220 = vpop.permute.xlu0 %1219
        %v1229 = vadd.f32 %v1149, %v1206
        %v1230 = vadd.f32 %v1150, %v1208
        %v1231 = vadd.f32 %v1151, %v1210
        %v1232 = vadd.f32 %v1152, %v1212
        %v1233 = vadd.f32 %v1153, %v1214
        %v1234 = vadd.f32 %v1154, %v1216
        %v1235 = vadd.f32 %v1155, %v1218
        %v1236 = vadd.f32 %v1156, %v1220
        %1237 = vset.pattern.permute.xlu0 3
        %1238 = vperm.xlu0 %1237, %v905
        %v1239 = vpop.permute.xlu0 %1238
        %1241 = vset.pattern.permute.xlu0 3
        %1242 = vperm.xlu0 %1241, %v920
        %v1243 = vpop.permute.xlu0 %1242
        %1245 = vset.pattern.permute.xlu0 3
        %1246 = vperm.xlu0 %1245, %v935
        %v1247 = vpop.permute.xlu0 %1246
        %1249 = vset.pattern.permute.xlu0 3
        %1250 = vperm.xlu0 %1249, %v950
        %v1251 = vpop.permute.xlu0 %1250
        %1253 = vset.pattern.permute.xlu0 3
        %1254 = vperm.xlu0 %1253, %v965
        %v1255 = vpop.permute.xlu0 %1254
        %1257 = vset.pattern.permute.xlu0 3
        %1258 = vperm.xlu0 %1257, %v980
        %v1259 = vpop.permute.xlu0 %1258
        %1261 = vset.pattern.permute.xlu0 3
        %1262 = vperm.xlu0 %1261, %v995
        %v1263 = vpop.permute.xlu0 %1262
        %1265 = vset.pattern.permute.xlu0 3
        %1266 = vperm.xlu0 %1265, %v1010
        %v1267 = vpop.permute.xlu0 %1266
        %v1269 = vmul.f32 %v1239, %v1013
        %v1270 = vmul.f32 %v1243, %v1014
        %v1271 = vmul.f32 %v1247, %v1015
        %v1272 = vmul.f32 %v1251, %v1016
        %v1273 = vmul.f32 %v1255, %v1017
        %v1274 = vmul.f32 %v1259, %v1018
        %v1275 = vmul.f32 %v1263, %v1019
        %v1276 = vmul.f32 %v1267, %v1020
        %1285 = vrot.lane.b32.xlu0 %v1269, 32
        %v1286 = vpop.permute.xlu0 %1285
        %1287 = vrot.lane.b32.xlu0 %v1270, 32
        %v1288 = vpop.permute.xlu0 %1287
        %1289 = vrot.lane.b32.xlu0 %v1271, 32
        %v1290 = vpop.permute.xlu0 %1289
        %1291 = vrot.lane.b32.xlu0 %v1272, 32
        %v1292 = vpop.permute.xlu0 %1291
        %1293 = vrot.lane.b32.xlu0 %v1273, 32
        %v1294 = vpop.permute.xlu0 %1293
        %1295 = vrot.lane.b32.xlu0 %v1274, 32
        %v1296 = vpop.permute.xlu0 %1295
        %1297 = vrot.lane.b32.xlu0 %v1275, 32
        %v1298 = vpop.permute.xlu0 %1297
        %1299 = vrot.lane.b32.xlu0 %v1276, 32
        %v1300 = vpop.permute.xlu0 %1299
        %v1309 = vadd.f32 %v1229, %v1286
        %v1310 = vadd.f32 %v1230, %v1288
        %v1311 = vadd.f32 %v1231, %v1290
        %v1312 = vadd.f32 %v1232, %v1292
        %v1313 = vadd.f32 %v1233, %v1294
        %v1314 = vadd.f32 %v1234, %v1296
        %v1315 = vadd.f32 %v1235, %v1298
        %v1316 = vadd.f32 %v1236, %v1300
        %v1317 = vld [vmem:[%s1012 + $0x8] sm:$0xff]
        %v1318 = vld [vmem:[%s1012 + $0x18] sm:$0xff]
        %v1319 = vld [vmem:[%s1012 + $0x28] sm:$0xff]
        %v1320 = vld [vmem:[%s1012 + $0x38] sm:$0xff]
        %v1321 = vld [vmem:[%s1012 + $0x48] sm:$0xff]
        %v1322 = vld [vmem:[%s1012 + $0x58] sm:$0xff]
        %v1323 = vld [vmem:[%s1012 + $0x68] sm:$0xff]
        %v1324 = vld [vmem:[%s1012 + $0x78] sm:$0xff]
        %1325 = vset.pattern.permute.xlu0 4
        %1326 = vperm.xlu0 %1325, %v905
        %v1327 = vpop.permute.xlu0 %1326
        %1329 = vset.pattern.permute.xlu0 4
        %1330 = vperm.xlu0 %1329, %v920
        %v1331 = vpop.permute.xlu0 %1330
        %1333 = vset.pattern.permute.xlu0 4
        %1334 = vperm.xlu0 %1333, %v935
        %v1335 = vpop.permute.xlu0 %1334
        %1337 = vset.pattern.permute.xlu0 4
        %1338 = vperm.xlu0 %1337, %v950
        %v1339 = vpop.permute.xlu0 %1338
        %1341 = vset.pattern.permute.xlu0 4
        %1342 = vperm.xlu0 %1341, %v965
        %v1343 = vpop.permute.xlu0 %1342
        %1345 = vset.pattern.permute.xlu0 4
        %1346 = vperm.xlu0 %1345, %v980
        %v1347 = vpop.permute.xlu0 %1346
        %1349 = vset.pattern.permute.xlu0 4
        %1350 = vperm.xlu0 %1349, %v995
        %v1351 = vpop.permute.xlu0 %1350
        %1353 = vset.pattern.permute.xlu0 4
        %1354 = vperm.xlu0 %1353, %v1010
        %v1355 = vpop.permute.xlu0 %1354
        %v1357 = vmul.f32 %v1327, %v1317
        %v1358 = vmul.f32 %v1331, %v1318
        %v1359 = vmul.f32 %v1335, %v1319
        %v1360 = vmul.f32 %v1339, %v1320
        %v1361 = vmul.f32 %v1343, %v1321
        %v1362 = vmul.f32 %v1347, %v1322
        %v1363 = vmul.f32 %v1351, %v1323
        %v1364 = vmul.f32 %v1355, %v1324
        %v1365 = vadd.f32 %v1309, %v1357
        %v1366 = vadd.f32 %v1310, %v1358
        %v1367 = vadd.f32 %v1311, %v1359
        %v1368 = vadd.f32 %v1312, %v1360
        %v1369 = vadd.f32 %v1313, %v1361
        %v1370 = vadd.f32 %v1314, %v1362
        %v1371 = vadd.f32 %v1315, %v1363
        %v1372 = vadd.f32 %v1316, %v1364
        %1373 = vset.pattern.permute.xlu0 5
        %1374 = vperm.xlu0 %1373, %v905
        %v1375 = vpop.permute.xlu0 %1374
        %1377 = vset.pattern.permute.xlu0 5
        %1378 = vperm.xlu0 %1377, %v920
        %v1379 = vpop.permute.xlu0 %1378
        %1381 = vset.pattern.permute.xlu0 5
        %1382 = vperm.xlu0 %1381, %v935
        %v1383 = vpop.permute.xlu0 %1382
        %1385 = vset.pattern.permute.xlu0 5
        %1386 = vperm.xlu0 %1385, %v950
        %v1387 = vpop.permute.xlu0 %1386
        %1389 = vset.pattern.permute.xlu0 5
        %1390 = vperm.xlu0 %1389, %v965
        %v1391 = vpop.permute.xlu0 %1390
        %1393 = vset.pattern.permute.xlu0 5
        %1394 = vperm.xlu0 %1393, %v980
        %v1395 = vpop.permute.xlu0 %1394
        %1397 = vset.pattern.permute.xlu0 5
        %1398 = vperm.xlu0 %1397, %v995
        %v1399 = vpop.permute.xlu0 %1398
        %1401 = vset.pattern.permute.xlu0 5
        %1402 = vperm.xlu0 %1401, %v1010
        %v1403 = vpop.permute.xlu0 %1402
        %v1405 = vmul.f32 %v1375, %v1317
        %v1406 = vmul.f32 %v1379, %v1318
        %v1407 = vmul.f32 %v1383, %v1319
        %v1408 = vmul.f32 %v1387, %v1320
        %v1409 = vmul.f32 %v1391, %v1321
        %v1410 = vmul.f32 %v1395, %v1322
        %v1411 = vmul.f32 %v1399, %v1323
        %v1412 = vmul.f32 %v1403, %v1324
        %1421 = vrot.lane.b32.xlu0 %v1405, 96
        %v1422 = vpop.permute.xlu0 %1421
        %1423 = vrot.lane.b32.xlu0 %v1406, 96
        %v1424 = vpop.permute.xlu0 %1423
        %1425 = vrot.lane.b32.xlu0 %v1407, 96
        %v1426 = vpop.permute.xlu0 %1425
        %1427 = vrot.lane.b32.xlu0 %v1408, 96
        %v1428 = vpop.permute.xlu0 %1427
        %1429 = vrot.lane.b32.xlu0 %v1409, 96
        %v1430 = vpop.permute.xlu0 %1429
        %1431 = vrot.lane.b32.xlu0 %v1410, 96
        %v1432 = vpop.permute.xlu0 %1431
        %1433 = vrot.lane.b32.xlu0 %v1411, 96
        %v1434 = vpop.permute.xlu0 %1433
        %1435 = vrot.lane.b32.xlu0 %v1412, 96
        %v1436 = vpop.permute.xlu0 %1435
        %v1445 = vadd.f32 %v1365, %v1422
        %v1446 = vadd.f32 %v1366, %v1424
        %v1447 = vadd.f32 %v1367, %v1426
        %v1448 = vadd.f32 %v1368, %v1428
        %v1449 = vadd.f32 %v1369, %v1430
        %v1450 = vadd.f32 %v1370, %v1432
        %v1451 = vadd.f32 %v1371, %v1434
        %v1452 = vadd.f32 %v1372, %v1436
        %1453 = vset.pattern.permute.xlu0 6
        %1454 = vperm.xlu0 %1453, %v905
        %v1455 = vpop.permute.xlu0 %1454
        %1457 = vset.pattern.permute.xlu0 6
        %1458 = vperm.xlu0 %1457, %v920
        %v1459 = vpop.permute.xlu0 %1458
        %1461 = vset.pattern.permute.xlu0 6
        %1462 = vperm.xlu0 %1461, %v935
        %v1463 = vpop.permute.xlu0 %1462
        %1465 = vset.pattern.permute.xlu0 6
        %1466 = vperm.xlu0 %1465, %v950
        %v1467 = vpop.permute.xlu0 %1466
        %1469 = vset.pattern.permute.xlu0 6
        %1470 = vperm.xlu0 %1469, %v965
        %v1471 = vpop.permute.xlu0 %1470
        %1473 = vset.pattern.permute.xlu0 6
        %1474 = vperm.xlu0 %1473, %v980
        %v1475 = vpop.permute.xlu0 %1474
        %1477 = vset.pattern.permute.xlu0 6
        %1478 = vperm.xlu0 %1477, %v995
        %v1479 = vpop.permute.xlu0 %1478
        %1481 = vset.pattern.permute.xlu0 6
        %1482 = vperm.xlu0 %1481, %v1010
        %v1483 = vpop.permute.xlu0 %1482
        %v1485 = vmul.f32 %v1455, %v1317
        %v1486 = vmul.f32 %v1459, %v1318
        %v1487 = vmul.f32 %v1463, %v1319
        %v1488 = vmul.f32 %v1467, %v1320
        %v1489 = vmul.f32 %v1471, %v1321
        %v1490 = vmul.f32 %v1475, %v1322
        %v1491 = vmul.f32 %v1479, %v1323
        %v1492 = vmul.f32 %v1483, %v1324
        %1501 = vrot.lane.b32.xlu0 %v1485, 64
        %v1502 = vpop.permute.xlu0 %1501
        %1503 = vrot.lane.b32.xlu0 %v1486, 64
        %v1504 = vpop.permute.xlu0 %1503
        %1505 = vrot.lane.b32.xlu0 %v1487, 64
        %v1506 = vpop.permute.xlu0 %1505
        %1507 = vrot.lane.b32.xlu0 %v1488, 64
        %v1508 = vpop.permute.xlu0 %1507
        %1509 = vrot.lane.b32.xlu0 %v1489, 64
        %v1510 = vpop.permute.xlu0 %1509
        %1511 = vrot.lane.b32.xlu0 %v1490, 64
        %v1512 = vpop.permute.xlu0 %1511
        %1513 = vrot.lane.b32.xlu0 %v1491, 64
        %v1514 = vpop.permute.xlu0 %1513
        %1515 = vrot.lane.b32.xlu0 %v1492, 64
        %v1516 = vpop.permute.xlu0 %1515
        %v1525 = vadd.f32 %v1445, %v1502
        %v1526 = vadd.f32 %v1446, %v1504
        %v1527 = vadd.f32 %v1447, %v1506
        %v1528 = vadd.f32 %v1448, %v1508
        %v1529 = vadd.f32 %v1449, %v1510
        %v1530 = vadd.f32 %v1450, %v1512
        %v1531 = vadd.f32 %v1451, %v1514
        %v1532 = vadd.f32 %v1452, %v1516
        %1533 = vset.pattern.permute.xlu0 7
        %1534 = vperm.xlu0 %1533, %v905
        %v1535 = vpop.permute.xlu0 %1534
        %1537 = vset.pattern.permute.xlu0 7
        %1538 = vperm.xlu0 %1537, %v920
        %v1539 = vpop.permute.xlu0 %1538
        %1541 = vset.pattern.permute.xlu0 7
        %1542 = vperm.xlu0 %1541, %v935
        %v1543 = vpop.permute.xlu0 %1542
        %1545 = vset.pattern.permute.xlu0 7
        %1546 = vperm.xlu0 %1545, %v950
        %v1547 = vpop.permute.xlu0 %1546
        %1549 = vset.pattern.permute.xlu0 7
        %1550 = vperm.xlu0 %1549, %v965
        %v1551 = vpop.permute.xlu0 %1550
        %1553 = vset.pattern.permute.xlu0 7
        %1554 = vperm.xlu0 %1553, %v980
        %v1555 = vpop.permute.xlu0 %1554
        %1557 = vset.pattern.permute.xlu0 7
        %1558 = vperm.xlu0 %1557, %v995
        %v1559 = vpop.permute.xlu0 %1558
        %1561 = vset.pattern.permute.xlu0 7
        %1562 = vperm.xlu0 %1561, %v1010
        %v1563 = vpop.permute.xlu0 %1562
        %v1565 = vmul.f32 %v1535, %v1317
        %v1566 = vmul.f32 %v1539, %v1318
        %v1567 = vmul.f32 %v1543, %v1319
        %v1568 = vmul.f32 %v1547, %v1320
        %v1569 = vmul.f32 %v1551, %v1321
        %v1570 = vmul.f32 %v1555, %v1322
        %v1571 = vmul.f32 %v1559, %v1323
        %v1572 = vmul.f32 %v1563, %v1324
        %1581 = vrot.lane.b32.xlu0 %v1565, 32
        %v1582 = vpop.permute.xlu0 %1581
        %1583 = vrot.lane.b32.xlu0 %v1566, 32
        %v1584 = vpop.permute.xlu0 %1583
        %1585 = vrot.lane.b32.xlu0 %v1567, 32
        %v1586 = vpop.permute.xlu0 %1585
        %1587 = vrot.lane.b32.xlu0 %v1568, 32
        %v1588 = vpop.permute.xlu0 %1587
        %1589 = vrot.lane.b32.xlu0 %v1569, 32
        %v1590 = vpop.permute.xlu0 %1589
        %1591 = vrot.lane.b32.xlu0 %v1570, 32
        %v1592 = vpop.permute.xlu0 %1591
        %1593 = vrot.lane.b32.xlu0 %v1571, 32
        %v1594 = vpop.permute.xlu0 %1593
        %1595 = vrot.lane.b32.xlu0 %v1572, 32
        %v1596 = vpop.permute.xlu0 %1595
        %v1605 = vadd.f32 %v1525, %v1582
        %v1606 = vadd.f32 %v1526, %v1584
        %v1607 = vadd.f32 %v1527, %v1586
        %v1608 = vadd.f32 %v1528, %v1588
        %v1609 = vadd.f32 %v1529, %v1590
        %v1610 = vadd.f32 %v1530, %v1592
        %v1611 = vadd.f32 %v1531, %v1594
        %v1612 = vadd.f32 %v1532, %v1596
        %1613 = vst.msk [vmem:[%s295] sm:$0xff] %vm330, %v1605
        %1614 = vst.msk [vmem:[%s295 + $0x8] sm:$0xff] %vm330, %v1606
        %1615 = vst.msk [vmem:[%s295 + $0x10] sm:$0xff] %vm330, %v1607
        %1616 = vst.msk [vmem:[%s295 + $0x18] sm:$0xff] %vm330, %v1608
        %1617 = vst.msk [vmem:[%s295 + $0x20] sm:$0xff] %vm330, %v1609
        %1618 = vst.msk [vmem:[%s295 + $0x28] sm:$0xff] %vm330, %v1610
        %1619 = vst.msk [vmem:[%s295 + $0x30] sm:$0xff] %vm330, %v1611
        %1620 = vst.msk [vmem:[%s295 + $0x38] sm:$0xff] %vm330, %v1612
        %1621 = vst.msk [vmem:[%s301] sm:$0xff] %vm818, %v905
        %1622 = vst.msk [vmem:[%s301 + $0x8] sm:$0xff] %vm818, %v920
        %1623 = vst.msk [vmem:[%s301 + $0x10] sm:$0xff] %vm818, %v935
        %1624 = vst.msk [vmem:[%s301 + $0x18] sm:$0xff] %vm818, %v950
        %1625 = vst.msk [vmem:[%s301 + $0x20] sm:$0xff] %vm818, %v965
        %1626 = vst.msk [vmem:[%s301 + $0x28] sm:$0xff] %vm818, %v980
        %1627 = vst.msk [vmem:[%s301 + $0x30] sm:$0xff] %vm818, %v995
        %1628 = vst.msk [vmem:[%s301 + $0x38] sm:$0xff] %vm818, %v1010
        %s1629 = smul.u32 8, %s22
        %p1630 = scmp.lt.s32.totalorder %s1629, 31
        %s1631 = scalar_select %p1630, %s1629, 31
        %s1632 = smul.addr %s1631, 8
        %s1633 = scalar_lea.vmem %s3, %s1632
        %s1634 = smul.u32 8, %s22
        %p1635 = scmp.lt.s32.totalorder %s1634, 31
        %s1636 = scalar_select %p1635, %s1634, 31
        %s1637 = smul.addr %s1636, 8
        %s1638 = scalar_lea.vmem %s4, %s1637
        // Predicated region
        $region41: #{tpu_custom_call.1} parent=31 // pred_check
          %p1639 = pneg %p118
        $region42: #{tpu_custom_call.1} parent=31 // pred_check_branch
          %1641 = sbr.rel (%p1639) target = $region44
        $region43: #{tpu_custom_call.1} parent=31 // pred_region
          %s1642 = smul.u32 8, %s22
        $region44: #{tpu_custom_call.1} parent=31 // pred_fallthru
          _
        // Predicated region
        $region45: #{tpu_custom_call.1} parent=31 // pred_check
          %p1643 = pneg %p144
        $region46: #{tpu_custom_call.1} parent=31 // pred_check_branch
          %1645 = sbr.rel (%p1643) target = $region48
        $region47: #{tpu_custom_call.1} parent=31 // pred_region
          %s1646 = smul.u32 8, %s22
        $region48: #{tpu_custom_call.1} parent=31 // pred_fallthru
          _
      $region32: #{tpu_custom_call.1} parent=5 // pred_fallthru
        _
      %p1647 = scmp.le.s32.totalorder 2, %s17
      // Predicated region
      $region49: #{tpu_custom_call.1} parent=5 // pred_check
        %p1648 = pneg %p1647
      $region50: #{tpu_custom_call.1} parent=5 // pred_check_branch
        %1650 = sbr.rel (%p1648) target = $region52
      $region51: #{tpu_custom_call.1} parent=5 // pred_region
        %s1651 = ssub.s32 %s17, 2
        // Predicated region
        $region53: #{tpu_custom_call.1} parent=51 // pred_check
          %p1652 = pneg %p124
        $region54: #{tpu_custom_call.1} parent=51 // pred_check_branch
          %1654 = sbr.rel (%p1652) target = $region56
        $region55: #{tpu_custom_call.1} parent=51 // pred_region
          %s1655 = smul.u32 8, %s23
          %p1656 = scmp.lt.s32.totalorder %s1655, 31
          %s1657 = scalar_select %p1656, %s1655, 31
          %s1658 = smul.addr %s1657, 8
          %s1659 = scalar_lea.vmem %s3, %s1658
        $region56: #{tpu_custom_call.1} parent=51 // pred_fallthru
          _
        // Predicated region
        $region57: #{tpu_custom_call.1} parent=51 // pred_check
          %p1660 = pneg %p150
        $region58: #{tpu_custom_call.1} parent=51 // pred_check_branch
          %1662 = sbr.rel (%p1660) target = $region60
        $region59: #{tpu_custom_call.1} parent=51 // pred_region
          %s1663 = smul.u32 8, %s23
          %p1664 = scmp.lt.s32.totalorder %s1663, 31
          %s1665 = scalar_select %p1664, %s1663, 31
          %s1666 = smul.addr %s1665, 8
          %s1667 = scalar_lea.vmem %s4, %s1666
        $region60: #{tpu_custom_call.1} parent=51 // pred_fallthru
          _
      $region52: #{tpu_custom_call.1} parent=5 // pred_fallthru
        _
    $region6: #{tpu_custom_call.1} parent=1 // loop_footer
      %s21 = sadd.s32 1, %s17
    $region7: #{tpu_custom_call.1} parent=1 // loop_footer_branch
      %16 = sbr.rel target = $region3
    $region8: #{tpu_custom_call.1} parent=1 // loop_exit
      _
    %1668 = vsyncpa [#allocation3], 1
    %s1669 = scalar_lea.sflag [#allocation3], 1
    %1670 = vsyncpa %s1669, 1
    %1671 = vsyncpa [#allocation5], 1
    %s1672 = scalar_lea.sflag [#allocation5], 1
    %1673 = vsyncpa %s1672, 1

</llo_original>
